<compile_context>
chip_gen: v5e
topology: v5e:2x2
jax: 0.10.0
libtpu: 0.0.40
codegen_flags: <defaults>
</compile_context>

<pallas_src>
import jax
import jax.numpy as jnp
from jax.experimental import pallas as pl
from jax.experimental.pallas import tpu as pltpu

EPS = 1e-5


def conv_bn_relu_kernel(w_ref, x_ref, gamma_ref, beta_ref, o_ref):
    # ---- in-kernel bf16 cast (VPU) + 1x1 conv as a single MXU matmul ----
    w_bf = w_ref[...].astype(jnp.bfloat16)          # (Cout, Cin)
    x_bf = x_ref[...].astype(jnp.bfloat16)          # (Cin, M)
    y = jnp.dot(w_bf, x_bf, preferred_element_type=jnp.float32)   # (Cout, M) f32

    # ---- BatchNorm2d (training mode: batch stats over the M spatial positions) ----
    m = y.shape[1]
    inv_m = 1.0 / m
    mean = jnp.sum(y, axis=1, keepdims=True) * inv_m                     # (Cout, 1)
    centered = y - mean
    var = jnp.sum(centered * centered, axis=1, keepdims=True) * inv_m    # biased var

    # ---- fused scale/shift + ReLU (single full-tile FMA pass) ----
    scale = gamma_ref[...] * jax.lax.rsqrt(var + EPS)                    # (Cout, 1)
    o_ref[...] = jnp.maximum(centered * scale + beta_ref[...], 0.0).astype(o_ref.dtype)


def conv_bn_relu(x_nchw, w_oihw, gamma, beta):
    n, cin, h, w = x_nchw.shape
    cout = w_oihw.shape[0]
    m = n * h * w

    # NCHW -> (Cin, M): pure reshape when N == 1 (the module's batch size).
    if n == 1:
        x2d = x_nchw.reshape(cin, m)
    else:
        x2d = jnp.transpose(x_nchw, (1, 0, 2, 3)).reshape(cin, m)

    w2d = w_oihw.reshape(cout, cin)        # (Cout, Cin) — reshape only, no transpose
    g2d = gamma.reshape(cout, 1)
    b2d = beta.reshape(cout, 1)

    cost = pl.CostEstimate(
        flops=2 * m * cin * cout,
        transcendentals=cout,
        bytes_accessed=(x2d.size + w2d.size + cout * m + 2 * cout) * 4,
    )

    out2d = pl.pallas_call(
        conv_bn_relu_kernel,
        out_shape=jax.ShapeDtypeStruct((cout, m), jnp.float32),
        grid_spec=pl.GridSpec(
            grid=(1,),
            in_specs=[
                pl.BlockSpec((cout, cin), lambda i: (0, 0)),   # full weight
                pl.BlockSpec((cin, m), lambda i: (0, 0)),      # full input
                pl.BlockSpec((cout, 1), lambda i: (0, 0)),     # gamma
                pl.BlockSpec((cout, 1), lambda i: (0, 0)),     # beta
            ],
            out_specs=pl.BlockSpec((cout, m), lambda i: (0, 0)),
        ),
        compiler_params=pltpu.CompilerParams(
            dimension_semantics=("arbitrary",),
        ),
        cost_estimate=cost,
    )(w2d, x2d, g2d, b2d)

    # (Cout, M) -> NCHW with no transpose for N == 1.
    if n == 1:
        return out2d.reshape(1, cout, h, w)
    return jnp.transpose(out2d.reshape(cout, n, h, w), (1, 0, 2, 3))


if __name__ == "__main__":
    key = jax.random.PRNGKey(0)
    k_x, k_w, k_g, k_b = jax.random.split(key, 4)

    # Shapes implied by the module: input (1, 912, 14, 14), conv weight (192, 912, 1, 1)
    N, CIN, H, W = 1, 912, 14, 14
    COUT = 192

    x = jax.random.normal(k_x, (N, CIN, H, W), dtype=jnp.float32)
    conv_w = jax.random.normal(k_w, (COUT, CIN, 1, 1), dtype=jnp.float32) * 0.05
    # Fresh PyTorch BN init is gamma=1, beta=0; perturb slightly so the affine
    # path is actually exercised by the correctness check.
    bn_gamma = 1.0 + 0.1 * jax.random.normal(k_g, (COUT,), dtype=jnp.float32)
    bn_beta = 0.1 * jax.random.normal(k_b, (COUT,), dtype=jnp.float32)

    out = conv_bn_relu(x, conv_w, bn_gamma, bn_beta)
    jax.block_until_ready(out)

    # Plain-JAX reference following the same numerics path (bf16 conv operands,
    # f32 accumulation, f32 BN/ReLU with biased batch variance).
    xb = x.astype(jnp.bfloat16)
    wb = conv_w.reshape(COUT, CIN).astype(jnp.bfloat16)
    y_ref = jnp.einsum("nchw,oc->nohw", xb, wb, preferred_element_type=jnp.float32)
    mean = jnp.mean(y_ref, axis=(0, 2, 3), keepdims=True)
    var = jnp.mean((y_ref - mean) ** 2, axis=(0, 2, 3), keepdims=True)
    ref = jnp.maximum(
        bn_gamma.reshape(1, COUT, 1, 1) * (y_ref - mean) * jax.lax.rsqrt(var + EPS)
        + bn_beta.reshape(1, COUT, 1, 1),
        0.0,
    )

    assert out.shape == (N, COUT, H, W)
    assert out.dtype == jnp.float32
    assert jnp.allclose(out, ref, atol=2e-3, rtol=2e-3)

    print("KERNEL_OK")
</pallas_src>

<mosaic_0001>
module attributes {stable_mosaic.version = 11 : i64} {
  func.func @conv_bn_relu_kernel(%arg0: i32, %arg1: memref<192x912xf32, #tpu.memory_space<vmem>>, %arg2: memref<912x196xf32, #tpu.memory_space<vmem>>, %arg3: memref<192x1xf32, #tpu.memory_space<vmem>>, %arg4: memref<192x1xf32, #tpu.memory_space<vmem>>, %arg5: memref<192x196xf32, #tpu.memory_space<vmem>>) attributes {dimension_semantics = [#tpu.dimension_semantics<arbitrary>], iteration_bounds = array<i64: 1>, scalar_prefetch = 0 : i64, scratch_operands = 0 : i64, tpu.core_type = #tpu.core_type<tc>, window_params = [{pipeline_mode = #tpu.pipeline_mode<synchronous>, transform_indices = @transform_0, window_bounds = array<i64: 192, 912>}, {pipeline_mode = #tpu.pipeline_mode<synchronous>, transform_indices = @transform_1, window_bounds = array<i64: 912, 196>}, {pipeline_mode = #tpu.pipeline_mode<synchronous>, transform_indices = @transform_2, window_bounds = array<i64: 192, 1>}, {pipeline_mode = #tpu.pipeline_mode<synchronous>, transform_indices = @transform_3, window_bounds = array<i64: 192, 1>}, {pipeline_mode = #tpu.pipeline_mode<synchronous>, transform_indices = @transform_4, window_bounds = array<i64: 192, 196>}]} {
    %c0 = arith.constant 0 : index
    %c0_0 = arith.constant 0 : index
    %0 = vector.load %arg1[%c0, %c0_0] : memref<192x912xf32, #tpu.memory_space<vmem>>, vector<192x912xf32>
    %1 = arith.truncf %0 : vector<192x912xf32> to vector<192x912xbf16>
    %c0_1 = arith.constant 0 : index
    %c0_2 = arith.constant 0 : index
    %2 = vector.load %arg2[%c0_1, %c0_2] : memref<912x196xf32, #tpu.memory_space<vmem>>, vector<912x196xf32>
    %3 = arith.truncf %2 : vector<912x196xf32> to vector<912x196xbf16>
    %cst = arith.constant dense<0.000000e+00> : vector<192x196xf32>
    %4 = tpu.matmul %1, %3, %cst {dimension_numbers = #tpu.dot_dimension_numbers<[1], [0], [0], [1], [0, 0, 1, 1], [], []>} : vector<192x912xbf16>, vector<912x196xbf16>, vector<192x196xf32> -> vector<192x196xf32>
    %cst_3 = arith.constant dense<0.000000e+00> : vector<192xf32>
    %5 = vector.multi_reduction <add>, %4, %cst_3 [1] : vector<192x196xf32> to vector<192xf32>
    %6 = vector.shape_cast %5 : vector<192xf32> to vector<192x1xf32>
    %cst_4 = arith.constant 0.00510204071 : f32
    %7 = vector.broadcast %cst_4 : f32 to vector<192x1xf32>
    %8 = arith.mulf %6, %7 : vector<192x1xf32>
    %9 = vector.broadcast %8 : vector<192x1xf32> to vector<192x196xf32>
    %10 = arith.subf %4, %9 : vector<192x196xf32>
    %11 = arith.mulf %10, %10 : vector<192x196xf32>
    %cst_5 = arith.constant dense<0.000000e+00> : vector<192xf32>
    %12 = vector.multi_reduction <add>, %11, %cst_5 [1] : vector<192x196xf32> to vector<192xf32>
    %13 = vector.shape_cast %12 : vector<192xf32> to vector<192x1xf32>
    %cst_6 = arith.constant 0.00510204071 : f32
    %14 = vector.broadcast %cst_6 : f32 to vector<192x1xf32>
    %15 = arith.mulf %13, %14 : vector<192x1xf32>
    %c0_7 = arith.constant 0 : index
    %c0_8 = arith.constant 0 : index
    %16 = vector.load %arg3[%c0_7, %c0_8] : memref<192x1xf32, #tpu.memory_space<vmem>>, vector<192x1xf32>
    %cst_9 = arith.constant 9.99999974E-6 : f32
    %17 = vector.broadcast %cst_9 : f32 to vector<192x1xf32>
    %18 = arith.addf %15, %17 : vector<192x1xf32>
    %19 = math.rsqrt %18 : vector<192x1xf32>
    %20 = arith.mulf %16, %19 : vector<192x1xf32>
    %21 = vector.broadcast %20 : vector<192x1xf32> to vector<192x196xf32>
    %22 = arith.mulf %10, %21 : vector<192x196xf32>
    %c0_10 = arith.constant 0 : index
    %c0_11 = arith.constant 0 : index
    %23 = vector.load %arg4[%c0_10, %c0_11] : memref<192x1xf32, #tpu.memory_space<vmem>>, vector<192x1xf32>
    %24 = vector.broadcast %23 : vector<192x1xf32> to vector<192x196xf32>
    %25 = arith.addf %22, %24 : vector<192x196xf32>
    %cst_12 = arith.constant 0.000000e+00 : f32
    %26 = vector.broadcast %cst_12 : f32 to vector<192x196xf32>
    %27 = arith.maximumf %25, %26 : vector<192x196xf32>
    %c0_13 = arith.constant 0 : index
    %c0_14 = arith.constant 0 : index
    %28 = vector.load %arg5[%c0_13, %c0_14] : memref<192x196xf32, #tpu.memory_space<vmem>>, vector<192x196xf32>
    tpu.vector_store %arg5[%c0_13, %c0_14], %27 {strides = array<i32>} : memref<192x196xf32, #tpu.memory_space<vmem>>, vector<192x196xf32>,
    return
  }
  func.func @transform_0(%arg0: i32) -> (i32, i32) {
    %c0_i32 = arith.constant 0 : i32
    %c0_i32_0 = arith.constant 0 : i32
    %c0_i32_1 = arith.constant 0 : i32
    return %c0_i32, %c0_i32_0 : i32, i32
  }
  func.func @transform_1(%arg0: i32) -> (i32, i32) {
    %c0_i32 = arith.constant 0 : i32
    %c0_i32_0 = arith.constant 0 : i32
    %c0_i32_1 = arith.constant 0 : i32
    return %c0_i32, %c0_i32_0 : i32, i32
  }
  func.func @transform_2(%arg0: i32) -> (i32, i32) {
    %c0_i32 = arith.constant 0 : i32
    %c0_i32_0 = arith.constant 0 : i32
    %c0_i32_1 = arith.constant 0 : i32
    return %c0_i32, %c0_i32_0 : i32, i32
  }
  func.func @transform_3(%arg0: i32) -> (i32, i32) {
    %c0_i32 = arith.constant 0 : i32
    %c0_i32_0 = arith.constant 0 : i32
    %c0_i32_1 = arith.constant 0 : i32
    return %c0_i32, %c0_i32_0 : i32, i32
  }
  func.func @transform_4(%arg0: i32) -> (i32, i32) {
    %c0_i32 = arith.constant 0 : i32
    %c0_i32_0 = arith.constant 0 : i32
    %c0_i32_1 = arith.constant 0 : i32
    return %c0_i32, %c0_i32_0 : i32, i32
  }
}

</mosaic_0001>

<llo_original>
// kernel: tpu_custom_call.1
$region0: #{tpu_custom_call.1}
  #allocation0 [shape = 'u32[]', space=smem, size = 0x4, offset = 0x4, fixed_abs, tag = 'smem constant byte address 0x4 - core index']
  #allocation1 [shape = 'u32[72,128]{1,0:T(1,128)}', space=vmem, size = 0x9000, scoped, tag = 'internal scratch']
  %s0 = inlined_call_operand.vmem [shape: f32[192,912], index: 0, kind: input, shape index: {}]
  %s1 = inlined_call_operand.vmem [shape: f32[912,196], index: 1, kind: input, shape index: {}]
  %s2 = inlined_call_operand.vmem [shape: f32[192,1], index: 2, kind: input, shape index: {}]
  %s3 = inlined_call_operand.vmem [shape: f32[192,1], index: 3, kind: input, shape index: {}]
  %s4 = inlined_call_operand.hbm [shape: f32[192,196], index: 4, kind: output, shape index: {}]
  %s5 = sld [smem:[#allocation0]]
  $region26: #{tpu_custom_call.1} parent=0
    _
  %s7 = ssub.s32 1, %s5
  %s8 = scalar_select 0, %s7, %s5
  $region1: #{tpu_custom_call.1} parent=0
    #allocation2 [shape = 'u8[196608]{0}', space=vmem, size = 0x30000, scoped, tag = 'output window, operand 0, single buffered']
    #allocation3 [shape = 's32[1]{0}', space=sflag, size = 0x4, scoped, tag = 'scoped memory for tpu_custom_call.1']
    %9 = vsyncpa [#allocation3], 0
    // Predicated region
    $region2: #{tpu_custom_call.1} parent=1 // pred_check
      _
    $region3: #{tpu_custom_call.1} parent=1 // pred_check_branch
      %11 = sbr.rel (0) target = $region5
    $region4: #{tpu_custom_call.1} parent=1 // pred_region
      _
    $region5: #{tpu_custom_call.1} parent=1 // pred_fallthru
      _
    // Predicated region
    $region6: #{tpu_custom_call.1} parent=1 // pred_check
      _
    $region7: #{tpu_custom_call.1} parent=1 // pred_check_branch
      %13 = sbr.rel (0) target = $region9
    $region8: #{tpu_custom_call.1} parent=1 // pred_region
      _
    $region9: #{tpu_custom_call.1} parent=1 // pred_fallthru
      _
    // Predicated region
    $region10: #{tpu_custom_call.1} parent=1 // pred_check
      _
    $region11: #{tpu_custom_call.1} parent=1 // pred_check_branch
      %15 = sbr.rel (0) target = $region13
    $region12: #{tpu_custom_call.1} parent=1 // pred_region
      _
    $region13: #{tpu_custom_call.1} parent=1 // pred_fallthru
      _
    // Predicated region
    $region14: #{tpu_custom_call.1} parent=1 // pred_check
      _
    $region15: #{tpu_custom_call.1} parent=1 // pred_check_branch
      %17 = sbr.rel (0) target = $region17
    $region16: #{tpu_custom_call.1} parent=1 // pred_region
      _
    $region17: #{tpu_custom_call.1} parent=1 // pred_fallthru
      _
    %v19 = vld [vmem:[%s0] sm:$0xff]
    %v20 = vld [vmem:[%s0 + $0x8] sm:$0xff]
    %v21 = vld [vmem:[%s0 + $0x10] sm:$0xff]
    %v22 = vld [vmem:[%s0 + $0x18] sm:$0xff]
    %v23 = vld [vmem:[%s0 + $0x20] sm:$0xff]
    %v24 = vld [vmem:[%s0 + $0x28] sm:$0xff]
    %v25 = vld [vmem:[%s0 + $0x30] sm:$0xff]
    %v26 = vld [vmem:[%s0 + $0x38] sm:$0xff]
    %v27 = vld [vmem:[%s0 + $0x40] sm:$0xff]
    %v28 = vld [vmem:[%s0 + $0x48] sm:$0xff]
    %v29 = vld [vmem:[%s0 + $0x50] sm:$0xff]
    %v30 = vld [vmem:[%s0 + $0x58] sm:$0xff]
    %v31 = vld [vmem:[%s0 + $0x60] sm:$0xff]
    %v32 = vld [vmem:[%s0 + $0x68] sm:$0xff]
    %v33 = vld [vmem:[%s0 + $0x70] sm:$0xff]
    %v34 = vld [vmem:[%s0 + $0x78] sm:$0xff]
    %v35 = vld [vmem:[%s0 + $0x80] sm:$0xff]
    %v36 = vld [vmem:[%s0 + $0x88] sm:$0xff]
    %v37 = vld [vmem:[%s0 + $0x90] sm:$0xff]
    %v38 = vld [vmem:[%s0 + $0x98] sm:$0xff]
    %v39 = vld [vmem:[%s0 + $0xa0] sm:$0xff]
    %v40 = vld [vmem:[%s0 + $0xa8] sm:$0xff]
    %v41 = vld [vmem:[%s0 + $0xb0] sm:$0xff]
    %v42 = vld [vmem:[%s0 + $0xb8] sm:$0xff]
    %v43 = vld [vmem:[%s0 + $0xc0] sm:$0xff]
    %v44 = vld [vmem:[%s0 + $0xc8] sm:$0xff]
    %v45 = vld [vmem:[%s0 + $0xd0] sm:$0xff]
    %v46 = vld [vmem:[%s0 + $0xd8] sm:$0xff]
    %v47 = vld [vmem:[%s0 + $0xe0] sm:$0xff]
    %v48 = vld [vmem:[%s0 + $0xe8] sm:$0xff]
    %v49 = vld [vmem:[%s0 + $0xf0] sm:$0xff]
    %v50 = vld [vmem:[%s0 + $0xf8] sm:$0xff]
    %v51 = vld [vmem:[%s0 + $0x100] sm:$0xff]
    %v52 = vld [vmem:[%s0 + $0x108] sm:$0xff]
    %v53 = vld [vmem:[%s0 + $0x110] sm:$0xff]
    %v54 = vld [vmem:[%s0 + $0x118] sm:$0xff]
    %v55 = vld [vmem:[%s0 + $0x120] sm:$0xff]
    %v56 = vld [vmem:[%s0 + $0x128] sm:$0xff]
    %v57 = vld [vmem:[%s0 + $0x130] sm:$0xff]
    %v58 = vld [vmem:[%s0 + $0x138] sm:$0xff]
    %v59 = vld [vmem:[%s0 + $0x140] sm:$0xff]
    %v60 = vld [vmem:[%s0 + $0x148] sm:$0xff]
    %v61 = vld [vmem:[%s0 + $0x150] sm:$0xff]
    %v62 = vld [vmem:[%s0 + $0x158] sm:$0xff]
    %v63 = vld [vmem:[%s0 + $0x160] sm:$0xff]
    %v64 = vld [vmem:[%s0 + $0x168] sm:$0xff]
    %v65 = vld [vmem:[%s0 + $0x170] sm:$0xff]
    %v66 = vld [vmem:[%s0 + $0x178] sm:$0xff]
    %v67 = vld [vmem:[%s0 + $0x180] sm:$0xff]
    %v68 = vld [vmem:[%s0 + $0x188] sm:$0xff]
    %v69 = vld [vmem:[%s0 + $0x190] sm:$0xff]
    %v70 = vld [vmem:[%s0 + $0x198] sm:$0xff]
    %v71 = vld [vmem:[%s0 + $0x1a0] sm:$0xff]
    %v72 = vld [vmem:[%s0 + $0x1a8] sm:$0xff]
    %v73 = vld [vmem:[%s0 + $0x1b0] sm:$0xff]
    %v74 = vld [vmem:[%s0 + $0x1b8] sm:$0xff]
    %v75 = vld [vmem:[%s0 + $0x1c0] sm:$0xff]
    %v76 = vld [vmem:[%s0 + $0x1c8] sm:$0xff]
    %v77 = vld [vmem:[%s0 + $0x1d0] sm:$0xff]
    %v78 = vld [vmem:[%s0 + $0x1d8] sm:$0xff]
    %v79 = vld [vmem:[%s0 + $0x1e0] sm:$0xff]
    %v80 = vld [vmem:[%s0 + $0x1e8] sm:$0xff]
    %v81 = vld [vmem:[%s0 + $0x1f0] sm:$0xff]
    %v82 = vld [vmem:[%s0 + $0x1f8] sm:$0xff]
    %v83 = vld [vmem:[%s0 + $0x200] sm:$0xff]
    %v84 = vld [vmem:[%s0 + $0x208] sm:$0xff]
    %v85 = vld [vmem:[%s0 + $0x210] sm:$0xff]
    %v86 = vld [vmem:[%s0 + $0x218] sm:$0xff]
    %v87 = vld [vmem:[%s0 + $0x220] sm:$0xff]
    %v88 = vld [vmem:[%s0 + $0x228] sm:$0xff]
    %v89 = vld [vmem:[%s0 + $0x230] sm:$0xff]
    %v90 = vld [vmem:[%s0 + $0x238] sm:$0xff]
    %v91 = vld [vmem:[%s0 + $0x240] sm:$0xff]
    %v92 = vld [vmem:[%s0 + $0x248] sm:$0xff]
    %v93 = vld [vmem:[%s0 + $0x250] sm:$0xff]
    %v94 = vld [vmem:[%s0 + $0x258] sm:$0xff]
    %v95 = vld [vmem:[%s0 + $0x260] sm:$0xff]
    %v96 = vld [vmem:[%s0 + $0x268] sm:$0xff]
    %v97 = vld [vmem:[%s0 + $0x270] sm:$0xff]
    %v98 = vld [vmem:[%s0 + $0x278] sm:$0xff]
    %v99 = vld [vmem:[%s0 + $0x280] sm:$0xff]
    %v100 = vld [vmem:[%s0 + $0x288] sm:$0xff]
    %v101 = vld [vmem:[%s0 + $0x290] sm:$0xff]
    %v102 = vld [vmem:[%s0 + $0x298] sm:$0xff]
    %v103 = vld [vmem:[%s0 + $0x2a0] sm:$0xff]
    %v104 = vld [vmem:[%s0 + $0x2a8] sm:$0xff]
    %v105 = vld [vmem:[%s0 + $0x2b0] sm:$0xff]
    %v106 = vld [vmem:[%s0 + $0x2b8] sm:$0xff]
    %v107 = vld [vmem:[%s0 + $0x2c0] sm:$0xff]
    %v108 = vld [vmem:[%s0 + $0x2c8] sm:$0xff]
    %v109 = vld [vmem:[%s0 + $0x2d0] sm:$0xff]
    %v110 = vld [vmem:[%s0 + $0x2d8] sm:$0xff]
    %v111 = vld [vmem:[%s0 + $0x2e0] sm:$0xff]
    %v112 = vld [vmem:[%s0 + $0x2e8] sm:$0xff]
    %v113 = vld [vmem:[%s0 + $0x2f0] sm:$0xff]
    %v114 = vld [vmem:[%s0 + $0x2f8] sm:$0xff]
    %v115 = vld [vmem:[%s0 + $0x300] sm:$0xff]
    %v116 = vld [vmem:[%s0 + $0x308] sm:$0xff]
    %v117 = vld [vmem:[%s0 + $0x310] sm:$0xff]
    %v118 = vld [vmem:[%s0 + $0x318] sm:$0xff]
    %v119 = vld [vmem:[%s0 + $0x320] sm:$0xff]
    %v120 = vld [vmem:[%s0 + $0x328] sm:$0xff]
    %v121 = vld [vmem:[%s0 + $0x330] sm:$0xff]
    %v122 = vld [vmem:[%s0 + $0x338] sm:$0xff]
    %v123 = vld [vmem:[%s0 + $0x340] sm:$0xff]
    %v124 = vld [vmem:[%s0 + $0x348] sm:$0xff]
    %v125 = vld [vmem:[%s0 + $0x350] sm:$0xff]
    %v126 = vld [vmem:[%s0 + $0x358] sm:$0xff]
    %v127 = vld [vmem:[%s0 + $0x360] sm:$0xff]
    %v128 = vld [vmem:[%s0 + $0x368] sm:$0xff]
    %v129 = vld [vmem:[%s0 + $0x370] sm:$0xff]
    %v130 = vld [vmem:[%s0 + $0x378] sm:$0xff]
    %v131 = vld [vmem:[%s0 + $0x380] sm:$0xff]
    %v132 = vld [vmem:[%s0 + $0x388] sm:$0xff]
    %v133 = vld [vmem:[%s0 + $0x390] sm:$0xff]
    %v134 = vld [vmem:[%s0 + $0x398] sm:$0xff]
    %v135 = vld [vmem:[%s0 + $0x3a0] sm:$0xff]
    %v136 = vld [vmem:[%s0 + $0x3a8] sm:$0xff]
    %v137 = vld [vmem:[%s0 + $0x3b0] sm:$0xff]
    %v138 = vld [vmem:[%s0 + $0x3b8] sm:$0xff]
    %v139 = vld [vmem:[%s0 + $0x3c0] sm:$0xff]
    %v140 = vld [vmem:[%s0 + $0x3c8] sm:$0xff]
    %v141 = vld [vmem:[%s0 + $0x3d0] sm:$0xff]
    %v142 = vld [vmem:[%s0 + $0x3d8] sm:$0xff]
    %v143 = vld [vmem:[%s0 + $0x3e0] sm:$0xff]
    %v144 = vld [vmem:[%s0 + $0x3e8] sm:$0xff]
    %v145 = vld [vmem:[%s0 + $0x3f0] sm:$0xff]
    %v146 = vld [vmem:[%s0 + $0x3f8] sm:$0xff]
    %v147 = vld [vmem:[%s0 + $0x400] sm:$0xff]
    %v148 = vld [vmem:[%s0 + $0x408] sm:$0xff]
    %v149 = vld [vmem:[%s0 + $0x410] sm:$0xff]
    %v150 = vld [vmem:[%s0 + $0x418] sm:$0xff]
    %v151 = vld [vmem:[%s0 + $0x420] sm:$0xff]
    %v152 = vld [vmem:[%s0 + $0x428] sm:$0xff]
    %v153 = vld [vmem:[%s0 + $0x430] sm:$0xff]
    %v154 = vld [vmem:[%s0 + $0x438] sm:$0xff]
    %v155 = vld [vmem:[%s0 + $0x440] sm:$0xff]
    %v156 = vld [vmem:[%s0 + $0x448] sm:$0xff]
    %v157 = vld [vmem:[%s0 + $0x450] sm:$0xff]
    %v158 = vld [vmem:[%s0 + $0x458] sm:$0xff]
    %v159 = vld [vmem:[%s0 + $0x460] sm:$0xff]
    %v160 = vld [vmem:[%s0 + $0x468] sm:$0xff]
    %v161 = vld [vmem:[%s0 + $0x470] sm:$0xff]
    %v162 = vld [vmem:[%s0 + $0x478] sm:$0xff]
    %v163 = vld [vmem:[%s0 + $0x480] sm:$0xff]
    %v164 = vld [vmem:[%s0 + $0x488] sm:$0xff]
    %v165 = vld [vmem:[%s0 + $0x490] sm:$0xff]
    %v166 = vld [vmem:[%s0 + $0x498] sm:$0xff]
    %v167 = vld [vmem:[%s0 + $0x4a0] sm:$0xff]
    %v168 = vld [vmem:[%s0 + $0x4a8] sm:$0xff]
    %v169 = vld [vmem:[%s0 + $0x4b0] sm:$0xff]
    %v170 = vld [vmem:[%s0 + $0x4b8] sm:$0xff]
    %v171 = vld [vmem:[%s0 + $0x4c0] sm:$0xff]
    %v172 = vld [vmem:[%s0 + $0x4c8] sm:$0xff]
    %v173 = vld [vmem:[%s0 + $0x4d0] sm:$0xff]
    %v174 = vld [vmem:[%s0 + $0x4d8] sm:$0xff]
    %v175 = vld [vmem:[%s0 + $0x4e0] sm:$0xff]
    %v176 = vld [vmem:[%s0 + $0x4e8] sm:$0xff]
    %v177 = vld [vmem:[%s0 + $0x4f0] sm:$0xff]
    %v178 = vld [vmem:[%s0 + $0x4f8] sm:$0xff]
    %v179 = vld [vmem:[%s0 + $0x500] sm:$0xff]
    %v180 = vld [vmem:[%s0 + $0x508] sm:$0xff]
    %v181 = vld [vmem:[%s0 + $0x510] sm:$0xff]
    %v182 = vld [vmem:[%s0 + $0x518] sm:$0xff]
    %v183 = vld [vmem:[%s0 + $0x520] sm:$0xff]
    %v184 = vld [vmem:[%s0 + $0x528] sm:$0xff]
    %v185 = vld [vmem:[%s0 + $0x530] sm:$0xff]
    %v186 = vld [vmem:[%s0 + $0x538] sm:$0xff]
    %v187 = vld [vmem:[%s0 + $0x540] sm:$0xff]
    %v188 = vld [vmem:[%s0 + $0x548] sm:$0xff]
    %v189 = vld [vmem:[%s0 + $0x550] sm:$0xff]
    %v190 = vld [vmem:[%s0 + $0x558] sm:$0xff]
    %v191 = vld [vmem:[%s0 + $0x560] sm:$0xff]
    %v192 = vld [vmem:[%s0 + $0x568] sm:$0xff]
    %v193 = vld [vmem:[%s0 + $0x570] sm:$0xff]
    %v194 = vld [vmem:[%s0 + $0x578] sm:$0xff]
    %v195 = vld [vmem:[%s0 + $0x580] sm:$0xff]
    %v196 = vld [vmem:[%s0 + $0x588] sm:$0xff]
    %v197 = vld [vmem:[%s0 + $0x590] sm:$0xff]
    %v198 = vld [vmem:[%s0 + $0x598] sm:$0xff]
    %v199 = vld [vmem:[%s0 + $0x5a0] sm:$0xff]
    %v200 = vld [vmem:[%s0 + $0x5a8] sm:$0xff]
    %v201 = vld [vmem:[%s0 + $0x5b0] sm:$0xff]
    %v202 = vld [vmem:[%s0 + $0x5b8] sm:$0xff]
    %v203 = vld [vmem:[%s0 + $0x5c0] sm:$0xff]
    %v204 = vld [vmem:[%s0 + $0x5c8] sm:$0xff]
    %v205 = vld [vmem:[%s0 + $0x5d0] sm:$0xff]
    %v206 = vld [vmem:[%s0 + $0x5d8] sm:$0xff]
    %v207 = vld [vmem:[%s0 + $0x5e0] sm:$0xff]
    %v208 = vld [vmem:[%s0 + $0x5e8] sm:$0xff]
    %v209 = vld [vmem:[%s0 + $0x5f0] sm:$0xff]
    %v210 = vld [vmem:[%s0 + $0x5f8] sm:$0xff]
    %v211 = vpack.c.bf16 %v27, %v19
    %v212 = vpack.c.bf16 %v28, %v20
    %v213 = vpack.c.bf16 %v29, %v21
    %v214 = vpack.c.bf16 %v30, %v22
    %v215 = vpack.c.bf16 %v31, %v23
    %v216 = vpack.c.bf16 %v32, %v24
    %v217 = vpack.c.bf16 %v33, %v25
    %v218 = vpack.c.bf16 %v34, %v26
    %v219 = vpack.c.bf16 %v43, %v35
    %v220 = vpack.c.bf16 %v44, %v36
    %v221 = vpack.c.bf16 %v45, %v37
    %v222 = vpack.c.bf16 %v46, %v38
    %v223 = vpack.c.bf16 %v47, %v39
    %v224 = vpack.c.bf16 %v48, %v40
    %v225 = vpack.c.bf16 %v49, %v41
    %v226 = vpack.c.bf16 %v50, %v42
    %v227 = vpack.c.bf16 %v59, %v51
    %v228 = vpack.c.bf16 %v60, %v52
    %v229 = vpack.c.bf16 %v61, %v53
    %v230 = vpack.c.bf16 %v62, %v54
    %v231 = vpack.c.bf16 %v63, %v55
    %v232 = vpack.c.bf16 %v64, %v56
    %v233 = vpack.c.bf16 %v65, %v57
    %v234 = vpack.c.bf16 %v66, %v58
    %v235 = vpack.c.bf16 %v75, %v67
    %v236 = vpack.c.bf16 %v76, %v68
    %v237 = vpack.c.bf16 %v77, %v69
    %v238 = vpack.c.bf16 %v78, %v70
    %v239 = vpack.c.bf16 %v79, %v71
    %v240 = vpack.c.bf16 %v80, %v72
    %v241 = vpack.c.bf16 %v81, %v73
    %v242 = vpack.c.bf16 %v82, %v74
    %v243 = vpack.c.bf16 %v91, %v83
    %v244 = vpack.c.bf16 %v92, %v84
    %v245 = vpack.c.bf16 %v93, %v85
    %v246 = vpack.c.bf16 %v94, %v86
    %v247 = vpack.c.bf16 %v95, %v87
    %v248 = vpack.c.bf16 %v96, %v88
    %v249 = vpack.c.bf16 %v97, %v89
    %v250 = vpack.c.bf16 %v98, %v90
    %v251 = vpack.c.bf16 %v107, %v99
    %v252 = vpack.c.bf16 %v108, %v100
    %v253 = vpack.c.bf16 %v109, %v101
    %v254 = vpack.c.bf16 %v110, %v102
    %v255 = vpack.c.bf16 %v111, %v103
    %v256 = vpack.c.bf16 %v112, %v104
    %v257 = vpack.c.bf16 %v113, %v105
    %v258 = vpack.c.bf16 %v114, %v106
    %v259 = vpack.c.bf16 %v123, %v115
    %v260 = vpack.c.bf16 %v124, %v116
    %v261 = vpack.c.bf16 %v125, %v117
    %v262 = vpack.c.bf16 %v126, %v118
    %v263 = vpack.c.bf16 %v127, %v119
    %v264 = vpack.c.bf16 %v128, %v120
    %v265 = vpack.c.bf16 %v129, %v121
    %v266 = vpack.c.bf16 %v130, %v122
    %v267 = vpack.c.bf16 %v139, %v131
    %v268 = vpack.c.bf16 %v140, %v132
    %v269 = vpack.c.bf16 %v141, %v133
    %v270 = vpack.c.bf16 %v142, %v134
    %v271 = vpack.c.bf16 %v143, %v135
    %v272 = vpack.c.bf16 %v144, %v136
    %v273 = vpack.c.bf16 %v145, %v137
    %v274 = vpack.c.bf16 %v146, %v138
    %v275 = vpack.c.bf16 %v155, %v147
    %v276 = vpack.c.bf16 %v156, %v148
    %v277 = vpack.c.bf16 %v157, %v149
    %v278 = vpack.c.bf16 %v158, %v150
    %v279 = vpack.c.bf16 %v159, %v151
    %v280 = vpack.c.bf16 %v160, %v152
    %v281 = vpack.c.bf16 %v161, %v153
    %v282 = vpack.c.bf16 %v162, %v154
    %v283 = vpack.c.bf16 %v171, %v163
    %v284 = vpack.c.bf16 %v172, %v164
    %v285 = vpack.c.bf16 %v173, %v165
    %v286 = vpack.c.bf16 %v174, %v166
    %v287 = vpack.c.bf16 %v175, %v167
    %v288 = vpack.c.bf16 %v176, %v168
    %v289 = vpack.c.bf16 %v177, %v169
    %v290 = vpack.c.bf16 %v178, %v170
    %v291 = vpack.c.bf16 %v187, %v179
    %v292 = vpack.c.bf16 %v188, %v180
    %v293 = vpack.c.bf16 %v189, %v181
    %v294 = vpack.c.bf16 %v190, %v182
    %v295 = vpack.c.bf16 %v191, %v183
    %v296 = vpack.c.bf16 %v192, %v184
    %v297 = vpack.c.bf16 %v193, %v185
    %v298 = vpack.c.bf16 %v194, %v186
    %v299 = vpack.c.bf16 %v203, %v195
    %v300 = vpack.c.bf16 %v204, %v196
    %v301 = vpack.c.bf16 %v205, %v197
    %v302 = vpack.c.bf16 %v206, %v198
    %v303 = vpack.c.bf16 %v207, %v199
    %v304 = vpack.c.bf16 %v208, %v200
    %v305 = vpack.c.bf16 %v209, %v201
    %v306 = vpack.c.bf16 %v210, %v202
    %v307 = vld [vmem:[%s1] sm:$0xff]
    %v308 = vld [vmem:[%s1 + $0x8] sm:$0xff]
    %v309 = vld [vmem:[%s1 + $0x10] sm:$0xff]
    %v310 = vld [vmem:[%s1 + $0x18] sm:$0xff]
    %v311 = vld [vmem:[%s1 + $0x20] sm:$0xff]
    %v312 = vld [vmem:[%s1 + $0x28] sm:$0xff]
    %v313 = vld [vmem:[%s1 + $0x30] sm:$0xff]
    %v314 = vld [vmem:[%s1 + $0x38] sm:$0xff]
    %v315 = vld [vmem:[%s1 + $0x40] sm:$0xff]
    %v316 = vld [vmem:[%s1 + $0x48] sm:$0xff]
    %v317 = vld [vmem:[%s1 + $0x50] sm:$0xff]
    %v318 = vld [vmem:[%s1 + $0x58] sm:$0xff]
    %v319 = vld [vmem:[%s1 + $0x60] sm:$0xff]
    %v320 = vld [vmem:[%s1 + $0x68] sm:$0xff]
    %v321 = vld [vmem:[%s1 + $0x70] sm:$0xff]
    %v322 = vld [vmem:[%s1 + $0x78] sm:$0xff]
    %v323 = vld [vmem:[%s1 + $0x80] sm:$0xff]
    %v324 = vld [vmem:[%s1 + $0x88] sm:$0xff]
    %v325 = vld [vmem:[%s1 + $0x90] sm:$0xff]
    %v326 = vld [vmem:[%s1 + $0x98] sm:$0xff]
    %v327 = vld [vmem:[%s1 + $0xa0] sm:$0xff]
    %v328 = vld [vmem:[%s1 + $0xa8] sm:$0xff]
    %v329 = vld [vmem:[%s1 + $0xb0] sm:$0xff]
    %v330 = vld [vmem:[%s1 + $0xb8] sm:$0xff]
    %v331 = vld [vmem:[%s1 + $0xc0] sm:$0xff]
    %v332 = vld [vmem:[%s1 + $0xc8] sm:$0xff]
    %v333 = vld [vmem:[%s1 + $0xd0] sm:$0xff]
    %v334 = vld [vmem:[%s1 + $0xd8] sm:$0xff]
    %v335 = vld [vmem:[%s1 + $0xe0] sm:$0xff]
    %v336 = vld [vmem:[%s1 + $0xe8] sm:$0xff]
    %v337 = vld [vmem:[%s1 + $0xf0] sm:$0xff]
    %v338 = vld [vmem:[%s1 + $0xf8] sm:$0xff]
    %v339 = vld [vmem:[%s1 + $0x100] sm:$0xff]
    %v340 = vld [vmem:[%s1 + $0x108] sm:$0xff]
    %v341 = vld [vmem:[%s1 + $0x110] sm:$0xff]
    %v342 = vld [vmem:[%s1 + $0x118] sm:$0xff]
    %v343 = vld [vmem:[%s1 + $0x120] sm:$0xff]
    %v344 = vld [vmem:[%s1 + $0x128] sm:$0xff]
    %v345 = vld [vmem:[%s1 + $0x130] sm:$0xff]
    %v346 = vld [vmem:[%s1 + $0x138] sm:$0xff]
    %v347 = vld [vmem:[%s1 + $0x140] sm:$0xff]
    %v348 = vld [vmem:[%s1 + $0x148] sm:$0xff]
    %v349 = vld [vmem:[%s1 + $0x150] sm:$0xff]
    %v350 = vld [vmem:[%s1 + $0x158] sm:$0xff]
    %v351 = vld [vmem:[%s1 + $0x160] sm:$0xff]
    %v352 = vld [vmem:[%s1 + $0x168] sm:$0xff]
    %v353 = vld [vmem:[%s1 + $0x170] sm:$0xff]
    %v354 = vld [vmem:[%s1 + $0x178] sm:$0xff]
    %v355 = vld [vmem:[%s1 + $0x180] sm:$0xff]
    %v356 = vld [vmem:[%s1 + $0x188] sm:$0xff]
    %v357 = vld [vmem:[%s1 + $0x190] sm:$0xff]
    %v358 = vld [vmem:[%s1 + $0x198] sm:$0xff]
    %v359 = vld [vmem:[%s1 + $0x1a0] sm:$0xff]
    %v360 = vld [vmem:[%s1 + $0x1a8] sm:$0xff]
    %v361 = vld [vmem:[%s1 + $0x1b0] sm:$0xff]
    %v362 = vld [vmem:[%s1 + $0x1b8] sm:$0xff]
    %v363 = vld [vmem:[%s1 + $0x1c0] sm:$0xff]
    %v364 = vld [vmem:[%s1 + $0x1c8] sm:$0xff]
    %v365 = vld [vmem:[%s1 + $0x1d0] sm:$0xff]
    %v366 = vld [vmem:[%s1 + $0x1d8] sm:$0xff]
    %v367 = vld [vmem:[%s1 + $0x1e0] sm:$0xff]
    %v368 = vld [vmem:[%s1 + $0x1e8] sm:$0xff]
    %v369 = vld [vmem:[%s1 + $0x1f0] sm:$0xff]
    %v370 = vld [vmem:[%s1 + $0x1f8] sm:$0xff]
    %v371 = vld [vmem:[%s1 + $0x200] sm:$0xff]
    %v372 = vld [vmem:[%s1 + $0x208] sm:$0xff]
    %v373 = vld [vmem:[%s1 + $0x210] sm:$0xff]
    %v374 = vld [vmem:[%s1 + $0x218] sm:$0xff]
    %v375 = vld [vmem:[%s1 + $0x220] sm:$0xff]
    %v376 = vld [vmem:[%s1 + $0x228] sm:$0xff]
    %v377 = vld [vmem:[%s1 + $0x230] sm:$0xff]
    %v378 = vld [vmem:[%s1 + $0x238] sm:$0xff]
    %v379 = vld [vmem:[%s1 + $0x240] sm:$0xff]
    %v380 = vld [vmem:[%s1 + $0x248] sm:$0xff]
    %v381 = vld [vmem:[%s1 + $0x250] sm:$0xff]
    %v382 = vld [vmem:[%s1 + $0x258] sm:$0xff]
    %v383 = vld [vmem:[%s1 + $0x260] sm:$0xff]
    %v384 = vld [vmem:[%s1 + $0x268] sm:$0xff]
    %v385 = vld [vmem:[%s1 + $0x270] sm:$0xff]
    %v386 = vld [vmem:[%s1 + $0x278] sm:$0xff]
    %v387 = vld [vmem:[%s1 + $0x280] sm:$0xff]
    %v388 = vld [vmem:[%s1 + $0x288] sm:$0xff]
    %v389 = vld [vmem:[%s1 + $0x290] sm:$0xff]
    %v390 = vld [vmem:[%s1 + $0x298] sm:$0xff]
    %v391 = vld [vmem:[%s1 + $0x2a0] sm:$0xff]
    %v392 = vld [vmem:[%s1 + $0x2a8] sm:$0xff]
    %v393 = vld [vmem:[%s1 + $0x2b0] sm:$0xff]
    %v394 = vld [vmem:[%s1 + $0x2b8] sm:$0xff]
    %v395 = vld [vmem:[%s1 + $0x2c0] sm:$0xff]
    %v396 = vld [vmem:[%s1 + $0x2c8] sm:$0xff]
    %v397 = vld [vmem:[%s1 + $0x2d0] sm:$0xff]
    %v398 = vld [vmem:[%s1 + $0x2d8] sm:$0xff]
    %v399 = vld [vmem:[%s1 + $0x2e0] sm:$0xff]
    %v400 = vld [vmem:[%s1 + $0x2e8] sm:$0xff]
    %v401 = vld [vmem:[%s1 + $0x2f0] sm:$0xff]
    %v402 = vld [vmem:[%s1 + $0x2f8] sm:$0xff]
    %v403 = vld [vmem:[%s1 + $0x300] sm:$0xff]
    %v404 = vld [vmem:[%s1 + $0x308] sm:$0xff]
    %v405 = vld [vmem:[%s1 + $0x310] sm:$0xff]
    %v406 = vld [vmem:[%s1 + $0x318] sm:$0xff]
    %v407 = vld [vmem:[%s1 + $0x320] sm:$0xff]
    %v408 = vld [vmem:[%s1 + $0x328] sm:$0xff]
    %v409 = vld [vmem:[%s1 + $0x330] sm:$0xff]
    %v410 = vld [vmem:[%s1 + $0x338] sm:$0xff]
    %v411 = vld [vmem:[%s1 + $0x340] sm:$0xff]
    %v412 = vld [vmem:[%s1 + $0x348] sm:$0xff]
    %v413 = vld [vmem:[%s1 + $0x350] sm:$0xff]
    %v414 = vld [vmem:[%s1 + $0x358] sm:$0xff]
    %v415 = vld [vmem:[%s1 + $0x360] sm:$0xff]
    %v416 = vld [vmem:[%s1 + $0x368] sm:$0xff]
    %v417 = vld [vmem:[%s1 + $0x370] sm:$0xff]
    %v418 = vld [vmem:[%s1 + $0x378] sm:$0xff]
    %v419 = vld [vmem:[%s1 + $0x380] sm:$0xff]
    %v420 = vld [vmem:[%s1 + $0x388] sm:$0xff]
    %v421 = vld [vmem:[%s1 + $0x390] sm:$0xff]
    %v422 = vld [vmem:[%s1 + $0x398] sm:$0xff]
    %v423 = vld [vmem:[%s1 + $0x3a0] sm:$0xff]
    %v424 = vld [vmem:[%s1 + $0x3a8] sm:$0xff]
    %v425 = vld [vmem:[%s1 + $0x3b0] sm:$0xff]
    %v426 = vld [vmem:[%s1 + $0x3b8] sm:$0xff]
    %v427 = vld [vmem:[%s1 + $0x3c0] sm:$0xff]
    %v428 = vld [vmem:[%s1 + $0x3c8] sm:$0xff]
    %v429 = vld [vmem:[%s1 + $0x3d0] sm:$0xff]
    %v430 = vld [vmem:[%s1 + $0x3d8] sm:$0xff]
    %v431 = vld [vmem:[%s1 + $0x3e0] sm:$0xff]
    %v432 = vld [vmem:[%s1 + $0x3e8] sm:$0xff]
    %v433 = vld [vmem:[%s1 + $0x3f0] sm:$0xff]
    %v434 = vld [vmem:[%s1 + $0x3f8] sm:$0xff]
    %v435 = vld [vmem:[%s1 + $0x400] sm:$0xff]
    %v436 = vld [vmem:[%s1 + $0x408] sm:$0xff]
    %v437 = vld [vmem:[%s1 + $0x410] sm:$0xff]
    %v438 = vld [vmem:[%s1 + $0x418] sm:$0xff]
    %v439 = vld [vmem:[%s1 + $0x420] sm:$0xff]
    %v440 = vld [vmem:[%s1 + $0x428] sm:$0xff]
    %v441 = vld [vmem:[%s1 + $0x430] sm:$0xff]
    %v442 = vld [vmem:[%s1 + $0x438] sm:$0xff]
    %v443 = vld [vmem:[%s1 + $0x440] sm:$0xff]
    %v444 = vld [vmem:[%s1 + $0x448] sm:$0xff]
    %v445 = vld [vmem:[%s1 + $0x450] sm:$0xff]
    %v446 = vld [vmem:[%s1 + $0x458] sm:$0xff]
    %v447 = vld [vmem:[%s1 + $0x460] sm:$0xff]
    %v448 = vld [vmem:[%s1 + $0x468] sm:$0xff]
    %v449 = vld [vmem:[%s1 + $0x470] sm:$0xff]
    %v450 = vld [vmem:[%s1 + $0x478] sm:$0xff]
    %v451 = vld [vmem:[%s1 + $0x480] sm:$0xff]
    %v452 = vld [vmem:[%s1 + $0x488] sm:$0xff]
    %v453 = vld [vmem:[%s1 + $0x490] sm:$0xff]
    %v454 = vld [vmem:[%s1 + $0x498] sm:$0xff]
    %v455 = vld [vmem:[%s1 + $0x4a0] sm:$0xff]
    %v456 = vld [vmem:[%s1 + $0x4a8] sm:$0xff]
    %v457 = vld [vmem:[%s1 + $0x4b0] sm:$0xff]
    %v458 = vld [vmem:[%s1 + $0x4b8] sm:$0xff]
    %v459 = vld [vmem:[%s1 + $0x4c0] sm:$0xff]
    %v460 = vld [vmem:[%s1 + $0x4c8] sm:$0xff]
    %v461 = vld [vmem:[%s1 + $0x4d0] sm:$0xff]
    %v462 = vld [vmem:[%s1 + $0x4d8] sm:$0xff]
    %v463 = vld [vmem:[%s1 + $0x4e0] sm:$0xff]
    %v464 = vld [vmem:[%s1 + $0x4e8] sm:$0xff]
    %v465 = vld [vmem:[%s1 + $0x4f0] sm:$0xff]
    %v466 = vld [vmem:[%s1 + $0x4f8] sm:$0xff]
    %v467 = vld [vmem:[%s1 + $0x500] sm:$0xff]
    %v468 = vld [vmem:[%s1 + $0x508] sm:$0xff]
    %v469 = vld [vmem:[%s1 + $0x510] sm:$0xff]
    %v470 = vld [vmem:[%s1 + $0x518] sm:$0xff]
    %v471 = vld [vmem:[%s1 + $0x520] sm:$0xff]
    %v472 = vld [vmem:[%s1 + $0x528] sm:$0xff]
    %v473 = vld [vmem:[%s1 + $0x530] sm:$0xff]
    %v474 = vld [vmem:[%s1 + $0x538] sm:$0xff]
    %v475 = vld [vmem:[%s1 + $0x540] sm:$0xff]
    %v476 = vld [vmem:[%s1 + $0x548] sm:$0xff]
    %v477 = vld [vmem:[%s1 + $0x550] sm:$0xff]
    %v478 = vld [vmem:[%s1 + $0x558] sm:$0xff]
    %v479 = vld [vmem:[%s1 + $0x560] sm:$0xff]
    %v480 = vld [vmem:[%s1 + $0x568] sm:$0xff]
    %v481 = vld [vmem:[%s1 + $0x570] sm:$0xff]
    %v482 = vld [vmem:[%s1 + $0x578] sm:$0xff]
    %v483 = vld [vmem:[%s1 + $0x580] sm:$0xff]
    %v484 = vld [vmem:[%s1 + $0x588] sm:$0xff]
    %v485 = vld [vmem:[%s1 + $0x590] sm:$0xff]
    %v486 = vld [vmem:[%s1 + $0x598] sm:$0xff]
    %v487 = vld [vmem:[%s1 + $0x5a0] sm:$0xff]
    %v488 = vld [vmem:[%s1 + $0x5a8] sm:$0xff]
    %v489 = vld [vmem:[%s1 + $0x5b0] sm:$0xff]
    %v490 = vld [vmem:[%s1 + $0x5b8] sm:$0xff]
    %v491 = vld [vmem:[%s1 + $0x5c0] sm:$0xff]
    %v492 = vld [vmem:[%s1 + $0x5c8] sm:$0xff]
    %v493 = vld [vmem:[%s1 + $0x5d0] sm:$0xff]
    %v494 = vld [vmem:[%s1 + $0x5d8] sm:$0xff]
    %v495 = vld [vmem:[%s1 + $0x5e0] sm:$0xff]
    %v496 = vld [vmem:[%s1 + $0x5e8] sm:$0xff]
    %v497 = vld [vmem:[%s1 + $0x5f0] sm:$0xff]
    %v498 = vld [vmem:[%s1 + $0x5f8] sm:$0xff]
    %v499 = vld [vmem:[%s1 + $0x600] sm:$0xff]
    %v500 = vld [vmem:[%s1 + $0x608] sm:$0xff]
    %v501 = vld [vmem:[%s1 + $0x610] sm:$0xff]
    %v502 = vld [vmem:[%s1 + $0x618] sm:$0xff]
    %v503 = vld [vmem:[%s1 + $0x620] sm:$0xff]
    %v504 = vld [vmem:[%s1 + $0x628] sm:$0xff]
    %v505 = vld [vmem:[%s1 + $0x630] sm:$0xff]
    %v506 = vld [vmem:[%s1 + $0x638] sm:$0xff]
    %v507 = vld [vmem:[%s1 + $0x640] sm:$0xff]
    %v508 = vld [vmem:[%s1 + $0x648] sm:$0xff]
    %v509 = vld [vmem:[%s1 + $0x650] sm:$0xff]
    %v510 = vld [vmem:[%s1 + $0x658] sm:$0xff]
    %v511 = vld [vmem:[%s1 + $0x660] sm:$0xff]
    %v512 = vld [vmem:[%s1 + $0x668] sm:$0xff]
    %v513 = vld [vmem:[%s1 + $0x670] sm:$0xff]
    %v514 = vld [vmem:[%s1 + $0x678] sm:$0xff]
    %v515 = vld [vmem:[%s1 + $0x680] sm:$0xff]
    %v516 = vld [vmem:[%s1 + $0x688] sm:$0xff]
    %v517 = vld [vmem:[%s1 + $0x690] sm:$0xff]
    %v518 = vld [vmem:[%s1 + $0x698] sm:$0xff]
    %v519 = vld [vmem:[%s1 + $0x6a0] sm:$0xff]
    %v520 = vld [vmem:[%s1 + $0x6a8] sm:$0xff]
    %v521 = vld [vmem:[%s1 + $0x6b0] sm:$0xff]
    %v522 = vld [vmem:[%s1 + $0x6b8] sm:$0xff]
    %v523 = vld [vmem:[%s1 + $0x6c0] sm:$0xff]
    %v524 = vld [vmem:[%s1 + $0x6c8] sm:$0xff]
    %v525 = vld [vmem:[%s1 + $0x6d0] sm:$0xff]
    %v526 = vld [vmem:[%s1 + $0x6d8] sm:$0xff]
    %v527 = vld [vmem:[%s1 + $0x6e0] sm:$0xff]
    %v528 = vld [vmem:[%s1 + $0x6e8] sm:$0xff]
    %v529 = vld [vmem:[%s1 + $0x6f0] sm:$0xff]
    %v530 = vld [vmem:[%s1 + $0x6f8] sm:$0xff]
    %v531 = vld [vmem:[%s1 + $0x700] sm:$0xff]
    %v532 = vld [vmem:[%s1 + $0x708] sm:$0xff]
    %v533 = vld [vmem:[%s1 + $0x710] sm:$0xff]
    %v534 = vld [vmem:[%s1 + $0x718] sm:$0xff]
    %v535 = vpack.c.bf16 %v309, %v307
    %v536 = vpack.c.bf16 %v310, %v308
    %v537 = vpack.c.bf16 %v313, %v311
    %v538 = vpack.c.bf16 %v314, %v312
    %v539 = vpack.c.bf16 %v317, %v315
    %v540 = vpack.c.bf16 %v318, %v316
    %v541 = vpack.c.bf16 %v321, %v319
    %v542 = vpack.c.bf16 %v322, %v320
    %v543 = vpack.c.bf16 %v325, %v323
    %v544 = vpack.c.bf16 %v326, %v324
    %v545 = vpack.c.bf16 %v329, %v327
    %v546 = vpack.c.bf16 %v330, %v328
    %v547 = vpack.c.bf16 %v333, %v331
    %v548 = vpack.c.bf16 %v334, %v332
    %v549 = vpack.c.bf16 %v337, %v335
    %v550 = vpack.c.bf16 %v338, %v336
    %v551 = vpack.c.bf16 %v341, %v339
    %v552 = vpack.c.bf16 %v342, %v340
    %v553 = vpack.c.bf16 %v345, %v343
    %v554 = vpack.c.bf16 %v346, %v344
    %v555 = vpack.c.bf16 %v349, %v347
    %v556 = vpack.c.bf16 %v350, %v348
    %v557 = vpack.c.bf16 %v353, %v351
    %v558 = vpack.c.bf16 %v354, %v352
    %v559 = vpack.c.bf16 %v357, %v355
    %v560 = vpack.c.bf16 %v358, %v356
    %v561 = vpack.c.bf16 %v361, %v359
    %v562 = vpack.c.bf16 %v362, %v360
    %v563 = vpack.c.bf16 %v365, %v363
    %v564 = vpack.c.bf16 %v366, %v364
    %v565 = vpack.c.bf16 %v369, %v367
    %v566 = vpack.c.bf16 %v370, %v368
    %v567 = vpack.c.bf16 %v373, %v371
    %v568 = vpack.c.bf16 %v374, %v372
    %v569 = vpack.c.bf16 %v377, %v375
    %v570 = vpack.c.bf16 %v378, %v376
    %v571 = vpack.c.bf16 %v381, %v379
    %v572 = vpack.c.bf16 %v382, %v380
    %v573 = vpack.c.bf16 %v385, %v383
    %v574 = vpack.c.bf16 %v386, %v384
    %v575 = vpack.c.bf16 %v389, %v387
    %v576 = vpack.c.bf16 %v390, %v388
    %v577 = vpack.c.bf16 %v393, %v391
    %v578 = vpack.c.bf16 %v394, %v392
    %v579 = vpack.c.bf16 %v397, %v395
    %v580 = vpack.c.bf16 %v398, %v396
    %v581 = vpack.c.bf16 %v401, %v399
    %v582 = vpack.c.bf16 %v402, %v400
    %v583 = vpack.c.bf16 %v405, %v403
    %v584 = vpack.c.bf16 %v406, %v404
    %v585 = vpack.c.bf16 %v409, %v407
    %v586 = vpack.c.bf16 %v410, %v408
    %v587 = vpack.c.bf16 %v413, %v411
    %v588 = vpack.c.bf16 %v414, %v412
    %v589 = vpack.c.bf16 %v417, %v415
    %v590 = vpack.c.bf16 %v418, %v416
    %v591 = vpack.c.bf16 %v421, %v419
    %v592 = vpack.c.bf16 %v422, %v420
    %v593 = vpack.c.bf16 %v425, %v423
    %v594 = vpack.c.bf16 %v426, %v424
    %v595 = vpack.c.bf16 %v429, %v427
    %v596 = vpack.c.bf16 %v430, %v428
    %v597 = vpack.c.bf16 %v433, %v431
    %v598 = vpack.c.bf16 %v434, %v432
    %v599 = vpack.c.bf16 %v437, %v435
    %v600 = vpack.c.bf16 %v438, %v436
    %v601 = vpack.c.bf16 %v441, %v439
    %v602 = vpack.c.bf16 %v442, %v440
    %v603 = vpack.c.bf16 %v445, %v443
    %v604 = vpack.c.bf16 %v446, %v444
    %v605 = vpack.c.bf16 %v449, %v447
    %v606 = vpack.c.bf16 %v450, %v448
    %v607 = vpack.c.bf16 %v453, %v451
    %v608 = vpack.c.bf16 %v454, %v452
    %v609 = vpack.c.bf16 %v457, %v455
    %v610 = vpack.c.bf16 %v458, %v456
    %v611 = vpack.c.bf16 %v461, %v459
    %v612 = vpack.c.bf16 %v462, %v460
    %v613 = vpack.c.bf16 %v465, %v463
    %v614 = vpack.c.bf16 %v466, %v464
    %v615 = vpack.c.bf16 %v469, %v467
    %v616 = vpack.c.bf16 %v470, %v468
    %v617 = vpack.c.bf16 %v473, %v471
    %v618 = vpack.c.bf16 %v474, %v472
    %v619 = vpack.c.bf16 %v477, %v475
    %v620 = vpack.c.bf16 %v478, %v476
    %v621 = vpack.c.bf16 %v481, %v479
    %v622 = vpack.c.bf16 %v482, %v480
    %v623 = vpack.c.bf16 %v485, %v483
    %v624 = vpack.c.bf16 %v486, %v484
    %v625 = vpack.c.bf16 %v489, %v487
    %v626 = vpack.c.bf16 %v490, %v488
    %v627 = vpack.c.bf16 %v493, %v491
    %v628 = vpack.c.bf16 %v494, %v492
    %v629 = vpack.c.bf16 %v497, %v495
    %v630 = vpack.c.bf16 %v498, %v496
    %v631 = vpack.c.bf16 %v501, %v499
    %v632 = vpack.c.bf16 %v502, %v500
    %v633 = vpack.c.bf16 %v505, %v503
    %v634 = vpack.c.bf16 %v506, %v504
    %v635 = vpack.c.bf16 %v509, %v507
    %v636 = vpack.c.bf16 %v510, %v508
    %v637 = vpack.c.bf16 %v513, %v511
    %v638 = vpack.c.bf16 %v514, %v512
    %v639 = vpack.c.bf16 %v517, %v515
    %v640 = vpack.c.bf16 %v518, %v516
    %v641 = vpack.c.bf16 %v521, %v519
    %v642 = vpack.c.bf16 %v522, %v520
    %v643 = vpack.c.bf16 %v525, %v523
    %v644 = vpack.c.bf16 %v526, %v524
    %v645 = vpack.c.bf16 %v529, %v527
    %v646 = vpack.c.bf16 %v530, %v528
    %v647 = vpack.c.bf16 %v533, %v531
    %v648 = vpack.c.bf16 %v534, %v532
    %vm649 = vcmask 130048
    %v651 = vsel %vm649, %v218, 0
    %v654 = vsel %vm649, %v226, 0
    %v657 = vsel %vm649, %v234, 0
    %v660 = vsel %vm649, %v242, 0
    %v663 = vsel %vm649, %v250, 0
    %v666 = vsel %vm649, %v258, 0
    %v669 = vsel %vm649, %v266, 0
    %v672 = vsel %vm649, %v274, 0
    %v675 = vsel %vm649, %v282, 0
    %v678 = vsel %vm649, %v290, 0
    %v681 = vsel %vm649, %v298, 0
    %v684 = vsel %vm649, %v306, 0
    %686 = vmatpush.bf16.msra.mxu0 %v549
    %687 = vmatpush.bf16.msra.mxu0 %v547
    %688 = vmatpush.bf16.msra.mxu0 %v545
    %689 = vmatpush.bf16.msra.mxu0 %v543
    %690 = vmatpush.bf16.msra.mxu0 %v541
    %691 = vmatpush.bf16.msra.mxu0 %v539
    %692 = vmatpush.bf16.msra.mxu0 %v537
    %693 = vmatpush.bf16.msra.mxu0 %v535
    %694 = vmatmul.bf16.gmra.mxu0 %v211
    %v695 = vpop.f32.mrf.mxu0
    %v696 = vadd.f32 0.0, %v695
    %v697 = vpop.f32.mrf.mxu0
    %v698 = vadd.f32 0.0, %v697
    %699 = vmatmul.bf16.gmra.mxu0 %v219
    %v700 = vpop.f32.mrf.mxu0
    %v701 = vadd.f32 0.0, %v700
    %v702 = vpop.f32.mrf.mxu0
    %v703 = vadd.f32 0.0, %v702
    %704 = vmatmul.bf16.gmra.mxu0 %v227
    %v705 = vpop.f32.mrf.mxu0
    %v706 = vadd.f32 0.0, %v705
    %v707 = vpop.f32.mrf.mxu0
    %v708 = vadd.f32 0.0, %v707
    %709 = vmatmul.bf16.gmra.mxu0 %v235
    %v710 = vpop.f32.mrf.mxu0
    %v711 = vadd.f32 0.0, %v710
    %v712 = vpop.f32.mrf.mxu0
    %v713 = vadd.f32 0.0, %v712
    %714 = vmatmul.bf16.gmra.mxu0 %v243
    %v715 = vpop.f32.mrf.mxu0
    %v716 = vadd.f32 0.0, %v715
    %v717 = vpop.f32.mrf.mxu0
    %v718 = vadd.f32 0.0, %v717
    %719 = vmatmul.bf16.gmra.mxu0 %v251
    %v720 = vpop.f32.mrf.mxu0
    %v721 = vadd.f32 0.0, %v720
    %v722 = vpop.f32.mrf.mxu0
    %v723 = vadd.f32 0.0, %v722
    %724 = vmatmul.bf16.gmra.mxu0 %v259
    %v725 = vpop.f32.mrf.mxu0
    %v726 = vadd.f32 0.0, %v725
    %v727 = vpop.f32.mrf.mxu0
    %v728 = vadd.f32 0.0, %v727
    %729 = vmatmul.bf16.gmra.mxu0 %v267
    %v730 = vpop.f32.mrf.mxu0
    %v731 = vadd.f32 0.0, %v730
    %v732 = vpop.f32.mrf.mxu0
    %v733 = vadd.f32 0.0, %v732
    %734 = vmatmul.bf16.gmra.mxu0 %v275
    %v735 = vpop.f32.mrf.mxu0
    %v736 = vadd.f32 0.0, %v735
    %v737 = vpop.f32.mrf.mxu0
    %v738 = vadd.f32 0.0, %v737
    %739 = vmatmul.bf16.gmra.mxu0 %v283
    %v740 = vpop.f32.mrf.mxu0
    %v741 = vadd.f32 0.0, %v740
    %v742 = vpop.f32.mrf.mxu0
    %v743 = vadd.f32 0.0, %v742
    %744 = vmatmul.bf16.gmra.mxu0 %v291
    %v745 = vpop.f32.mrf.mxu0
    %v746 = vadd.f32 0.0, %v745
    %v747 = vpop.f32.mrf.mxu0
    %v748 = vadd.f32 0.0, %v747
    %749 = vmatmul.bf16.gmra.mxu0 %v299
    %v750 = vpop.f32.mrf.mxu0
    %v751 = vadd.f32 0.0, %v750
    %v752 = vpop.f32.mrf.mxu0
    %v753 = vadd.f32 0.0, %v752
    %754 = vdwg.mxu0
    %755 = vmatpush.bf16.msra.mxu0 %v565
    %756 = vmatpush.bf16.msra.mxu0 %v563
    %757 = vmatpush.bf16.msra.mxu0 %v561
    %758 = vmatpush.bf16.msra.mxu0 %v559
    %759 = vmatpush.bf16.msra.mxu0 %v557
    %760 = vmatpush.bf16.msra.mxu0 %v555
    %761 = vmatpush.bf16.msra.mxu0 %v553
    %762 = vmatpush.bf16.msra.mxu0 %v551
    %763 = vmatmul.bf16.gmra.mxu0 %v212
    %v764 = vpop.f32.mrf.mxu0
    %v765 = vadd.f32 %v696, %v764
    %v766 = vpop.f32.mrf.mxu0
    %v767 = vadd.f32 %v698, %v766
    %768 = vmatmul.bf16.gmra.mxu0 %v220
    %v769 = vpop.f32.mrf.mxu0
    %v770 = vadd.f32 %v701, %v769
    %v771 = vpop.f32.mrf.mxu0
    %v772 = vadd.f32 %v703, %v771
    %773 = vmatmul.bf16.gmra.mxu0 %v228
    %v774 = vpop.f32.mrf.mxu0
    %v775 = vadd.f32 %v706, %v774
    %v776 = vpop.f32.mrf.mxu0
    %v777 = vadd.f32 %v708, %v776
    %778 = vmatmul.bf16.gmra.mxu0 %v236
    %v779 = vpop.f32.mrf.mxu0
    %v780 = vadd.f32 %v711, %v779
    %v781 = vpop.f32.mrf.mxu0
    %v782 = vadd.f32 %v713, %v781
    %783 = vmatmul.bf16.gmra.mxu0 %v244
    %v784 = vpop.f32.mrf.mxu0
    %v785 = vadd.f32 %v716, %v784
    %v786 = vpop.f32.mrf.mxu0
    %v787 = vadd.f32 %v718, %v786
    %788 = vmatmul.bf16.gmra.mxu0 %v252
    %v789 = vpop.f32.mrf.mxu0
    %v790 = vadd.f32 %v721, %v789
    %v791 = vpop.f32.mrf.mxu0
    %v792 = vadd.f32 %v723, %v791
    %793 = vmatmul.bf16.gmra.mxu0 %v260
    %v794 = vpop.f32.mrf.mxu0
    %v795 = vadd.f32 %v726, %v794
    %v796 = vpop.f32.mrf.mxu0
    %v797 = vadd.f32 %v728, %v796
    %798 = vmatmul.bf16.gmra.mxu0 %v268
    %v799 = vpop.f32.mrf.mxu0
    %v800 = vadd.f32 %v731, %v799
    %v801 = vpop.f32.mrf.mxu0
    %v802 = vadd.f32 %v733, %v801
    %803 = vmatmul.bf16.gmra.mxu0 %v276
    %v804 = vpop.f32.mrf.mxu0
    %v805 = vadd.f32 %v736, %v804
    %v806 = vpop.f32.mrf.mxu0
    %v807 = vadd.f32 %v738, %v806
    %808 = vmatmul.bf16.gmra.mxu0 %v284
    %v809 = vpop.f32.mrf.mxu0
    %v810 = vadd.f32 %v741, %v809
    %v811 = vpop.f32.mrf.mxu0
    %v812 = vadd.f32 %v743, %v811
    %813 = vmatmul.bf16.gmra.mxu0 %v292
    %v814 = vpop.f32.mrf.mxu0
    %v815 = vadd.f32 %v746, %v814
    %v816 = vpop.f32.mrf.mxu0
    %v817 = vadd.f32 %v748, %v816
    %818 = vmatmul.bf16.gmra.mxu0 %v300
    %v819 = vpop.f32.mrf.mxu0
    %v820 = vadd.f32 %v751, %v819
    %v821 = vpop.f32.mrf.mxu0
    %v822 = vadd.f32 %v753, %v821
    %823 = vdwg.mxu0
    %824 = vmatpush.bf16.msra.mxu0 %v581
    %825 = vmatpush.bf16.msra.mxu0 %v579
    %826 = vmatpush.bf16.msra.mxu0 %v577
    %827 = vmatpush.bf16.msra.mxu0 %v575
    %828 = vmatpush.bf16.msra.mxu0 %v573
    %829 = vmatpush.bf16.msra.mxu0 %v571
    %830 = vmatpush.bf16.msra.mxu0 %v569
    %831 = vmatpush.bf16.msra.mxu0 %v567
    %832 = vmatmul.bf16.gmra.mxu0 %v213
    %v833 = vpop.f32.mrf.mxu0
    %v834 = vadd.f32 %v765, %v833
    %v835 = vpop.f32.mrf.mxu0
    %v836 = vadd.f32 %v767, %v835
    %837 = vmatmul.bf16.gmra.mxu0 %v221
    %v838 = vpop.f32.mrf.mxu0
    %v839 = vadd.f32 %v770, %v838
    %v840 = vpop.f32.mrf.mxu0
    %v841 = vadd.f32 %v772, %v840
    %842 = vmatmul.bf16.gmra.mxu0 %v229
    %v843 = vpop.f32.mrf.mxu0
    %v844 = vadd.f32 %v775, %v843
    %v845 = vpop.f32.mrf.mxu0
    %v846 = vadd.f32 %v777, %v845
    %847 = vmatmul.bf16.gmra.mxu0 %v237
    %v848 = vpop.f32.mrf.mxu0
    %v849 = vadd.f32 %v780, %v848
    %v850 = vpop.f32.mrf.mxu0
    %v851 = vadd.f32 %v782, %v850
    %852 = vmatmul.bf16.gmra.mxu0 %v245
    %v853 = vpop.f32.mrf.mxu0
    %v854 = vadd.f32 %v785, %v853
    %v855 = vpop.f32.mrf.mxu0
    %v856 = vadd.f32 %v787, %v855
    %857 = vmatmul.bf16.gmra.mxu0 %v253
    %v858 = vpop.f32.mrf.mxu0
    %v859 = vadd.f32 %v790, %v858
    %v860 = vpop.f32.mrf.mxu0
    %v861 = vadd.f32 %v792, %v860
    %862 = vmatmul.bf16.gmra.mxu0 %v261
    %v863 = vpop.f32.mrf.mxu0
    %v864 = vadd.f32 %v795, %v863
    %v865 = vpop.f32.mrf.mxu0
    %v866 = vadd.f32 %v797, %v865
    %867 = vmatmul.bf16.gmra.mxu0 %v269
    %v868 = vpop.f32.mrf.mxu0
    %v869 = vadd.f32 %v800, %v868
    %v870 = vpop.f32.mrf.mxu0
    %v871 = vadd.f32 %v802, %v870
    %872 = vmatmul.bf16.gmra.mxu0 %v277
    %v873 = vpop.f32.mrf.mxu0
    %v874 = vadd.f32 %v805, %v873
    %v875 = vpop.f32.mrf.mxu0
    %v876 = vadd.f32 %v807, %v875
    %877 = vmatmul.bf16.gmra.mxu0 %v285
    %v878 = vpop.f32.mrf.mxu0
    %v879 = vadd.f32 %v810, %v878
    %v880 = vpop.f32.mrf.mxu0
    %v881 = vadd.f32 %v812, %v880
    %882 = vmatmul.bf16.gmra.mxu0 %v293
    %v883 = vpop.f32.mrf.mxu0
    %v884 = vadd.f32 %v815, %v883
    %v885 = vpop.f32.mrf.mxu0
    %v886 = vadd.f32 %v817, %v885
    %887 = vmatmul.bf16.gmra.mxu0 %v301
    %v888 = vpop.f32.mrf.mxu0
    %v889 = vadd.f32 %v820, %v888
    %v890 = vpop.f32.mrf.mxu0
    %v891 = vadd.f32 %v822, %v890
    %892 = vdwg.mxu0
    %893 = vmatpush.bf16.msra.mxu0 %v597
    %894 = vmatpush.bf16.msra.mxu0 %v595
    %895 = vmatpush.bf16.msra.mxu0 %v593
    %896 = vmatpush.bf16.msra.mxu0 %v591
    %897 = vmatpush.bf16.msra.mxu0 %v589
    %898 = vmatpush.bf16.msra.mxu0 %v587
    %899 = vmatpush.bf16.msra.mxu0 %v585
    %900 = vmatpush.bf16.msra.mxu0 %v583
    %901 = vmatmul.bf16.gmra.mxu0 %v214
    %v902 = vpop.f32.mrf.mxu0
    %v903 = vadd.f32 %v834, %v902
    %v904 = vpop.f32.mrf.mxu0
    %v905 = vadd.f32 %v836, %v904
    %906 = vmatmul.bf16.gmra.mxu0 %v222
    %v907 = vpop.f32.mrf.mxu0
    %v908 = vadd.f32 %v839, %v907
    %v909 = vpop.f32.mrf.mxu0
    %v910 = vadd.f32 %v841, %v909
    %911 = vmatmul.bf16.gmra.mxu0 %v230
    %v912 = vpop.f32.mrf.mxu0
    %v913 = vadd.f32 %v844, %v912
    %v914 = vpop.f32.mrf.mxu0
    %v915 = vadd.f32 %v846, %v914
    %916 = vmatmul.bf16.gmra.mxu0 %v238
    %v917 = vpop.f32.mrf.mxu0
    %v918 = vadd.f32 %v849, %v917
    %v919 = vpop.f32.mrf.mxu0
    %v920 = vadd.f32 %v851, %v919
    %921 = vmatmul.bf16.gmra.mxu0 %v246
    %v922 = vpop.f32.mrf.mxu0
    %v923 = vadd.f32 %v854, %v922
    %v924 = vpop.f32.mrf.mxu0
    %v925 = vadd.f32 %v856, %v924
    %926 = vmatmul.bf16.gmra.mxu0 %v254
    %v927 = vpop.f32.mrf.mxu0
    %v928 = vadd.f32 %v859, %v927
    %v929 = vpop.f32.mrf.mxu0
    %v930 = vadd.f32 %v861, %v929
    %931 = vmatmul.bf16.gmra.mxu0 %v262
    %v932 = vpop.f32.mrf.mxu0
    %v933 = vadd.f32 %v864, %v932
    %v934 = vpop.f32.mrf.mxu0
    %v935 = vadd.f32 %v866, %v934
    %936 = vmatmul.bf16.gmra.mxu0 %v270
    %v937 = vpop.f32.mrf.mxu0
    %v938 = vadd.f32 %v869, %v937
    %v939 = vpop.f32.mrf.mxu0
    %v940 = vadd.f32 %v871, %v939
    %941 = vmatmul.bf16.gmra.mxu0 %v278
    %v942 = vpop.f32.mrf.mxu0
    %v943 = vadd.f32 %v874, %v942
    %v944 = vpop.f32.mrf.mxu0
    %v945 = vadd.f32 %v876, %v944
    %946 = vmatmul.bf16.gmra.mxu0 %v286
    %v947 = vpop.f32.mrf.mxu0
    %v948 = vadd.f32 %v879, %v947
    %v949 = vpop.f32.mrf.mxu0
    %v950 = vadd.f32 %v881, %v949
    %951 = vmatmul.bf16.gmra.mxu0 %v294
    %v952 = vpop.f32.mrf.mxu0
    %v953 = vadd.f32 %v884, %v952
    %v954 = vpop.f32.mrf.mxu0
    %v955 = vadd.f32 %v886, %v954
    %956 = vmatmul.bf16.gmra.mxu0 %v302
    %v957 = vpop.f32.mrf.mxu0
    %v958 = vadd.f32 %v889, %v957
    %v959 = vpop.f32.mrf.mxu0
    %v960 = vadd.f32 %v891, %v959
    %961 = vdwg.mxu0
    %962 = vmatpush.bf16.msra.mxu0 %v613
    %963 = vmatpush.bf16.msra.mxu0 %v611
    %964 = vmatpush.bf16.msra.mxu0 %v609
    %965 = vmatpush.bf16.msra.mxu0 %v607
    %966 = vmatpush.bf16.msra.mxu0 %v605
    %967 = vmatpush.bf16.msra.mxu0 %v603
    %968 = vmatpush.bf16.msra.mxu0 %v601
    %969 = vmatpush.bf16.msra.mxu0 %v599
    %970 = vmatmul.bf16.gmra.mxu0 %v215
    %v971 = vpop.f32.mrf.mxu0
    %v972 = vadd.f32 %v903, %v971
    %v973 = vpop.f32.mrf.mxu0
    %v974 = vadd.f32 %v905, %v973
    %975 = vmatmul.bf16.gmra.mxu0 %v223
    %v976 = vpop.f32.mrf.mxu0
    %v977 = vadd.f32 %v908, %v976
    %v978 = vpop.f32.mrf.mxu0
    %v979 = vadd.f32 %v910, %v978
    %980 = vmatmul.bf16.gmra.mxu0 %v231
    %v981 = vpop.f32.mrf.mxu0
    %v982 = vadd.f32 %v913, %v981
    %v983 = vpop.f32.mrf.mxu0
    %v984 = vadd.f32 %v915, %v983
    %985 = vmatmul.bf16.gmra.mxu0 %v239
    %v986 = vpop.f32.mrf.mxu0
    %v987 = vadd.f32 %v918, %v986
    %v988 = vpop.f32.mrf.mxu0
    %v989 = vadd.f32 %v920, %v988
    %990 = vmatmul.bf16.gmra.mxu0 %v247
    %v991 = vpop.f32.mrf.mxu0
    %v992 = vadd.f32 %v923, %v991
    %v993 = vpop.f32.mrf.mxu0
    %v994 = vadd.f32 %v925, %v993
    %995 = vmatmul.bf16.gmra.mxu0 %v255
    %v996 = vpop.f32.mrf.mxu0
    %v997 = vadd.f32 %v928, %v996
    %v998 = vpop.f32.mrf.mxu0
    %v999 = vadd.f32 %v930, %v998
    %1000 = vmatmul.bf16.gmra.mxu0 %v263
    %v1001 = vpop.f32.mrf.mxu0
    %v1002 = vadd.f32 %v933, %v1001
    %v1003 = vpop.f32.mrf.mxu0
    %v1004 = vadd.f32 %v935, %v1003
    %1005 = vmatmul.bf16.gmra.mxu0 %v271
    %v1006 = vpop.f32.mrf.mxu0
    %v1007 = vadd.f32 %v938, %v1006
    %v1008 = vpop.f32.mrf.mxu0
    %v1009 = vadd.f32 %v940, %v1008
    %1010 = vmatmul.bf16.gmra.mxu0 %v279
    %v1011 = vpop.f32.mrf.mxu0
    %v1012 = vadd.f32 %v943, %v1011
    %v1013 = vpop.f32.mrf.mxu0
    %v1014 = vadd.f32 %v945, %v1013
    %1015 = vmatmul.bf16.gmra.mxu0 %v287
    %v1016 = vpop.f32.mrf.mxu0
    %v1017 = vadd.f32 %v948, %v1016
    %v1018 = vpop.f32.mrf.mxu0
    %v1019 = vadd.f32 %v950, %v1018
    %1020 = vmatmul.bf16.gmra.mxu0 %v295
    %v1021 = vpop.f32.mrf.mxu0
    %v1022 = vadd.f32 %v953, %v1021
    %v1023 = vpop.f32.mrf.mxu0
    %v1024 = vadd.f32 %v955, %v1023
    %1025 = vmatmul.bf16.gmra.mxu0 %v303
    %v1026 = vpop.f32.mrf.mxu0
    %v1027 = vadd.f32 %v958, %v1026
    %v1028 = vpop.f32.mrf.mxu0
    %v1029 = vadd.f32 %v960, %v1028
    %1030 = vdwg.mxu0
    %1031 = vmatpush.bf16.msra.mxu0 %v629
    %1032 = vmatpush.bf16.msra.mxu0 %v627
    %1033 = vmatpush.bf16.msra.mxu0 %v625
    %1034 = vmatpush.bf16.msra.mxu0 %v623
    %1035 = vmatpush.bf16.msra.mxu0 %v621
    %1036 = vmatpush.bf16.msra.mxu0 %v619
    %1037 = vmatpush.bf16.msra.mxu0 %v617
    %1038 = vmatpush.bf16.msra.mxu0 %v615
    %1039 = vmatmul.bf16.gmra.mxu0 %v216
    %v1040 = vpop.f32.mrf.mxu0
    %v1041 = vadd.f32 %v972, %v1040
    %v1042 = vpop.f32.mrf.mxu0
    %v1043 = vadd.f32 %v974, %v1042
    %1044 = vmatmul.bf16.gmra.mxu0 %v224
    %v1045 = vpop.f32.mrf.mxu0
    %v1046 = vadd.f32 %v977, %v1045
    %v1047 = vpop.f32.mrf.mxu0
    %v1048 = vadd.f32 %v979, %v1047
    %1049 = vmatmul.bf16.gmra.mxu0 %v232
    %v1050 = vpop.f32.mrf.mxu0
    %v1051 = vadd.f32 %v982, %v1050
    %v1052 = vpop.f32.mrf.mxu0
    %v1053 = vadd.f32 %v984, %v1052
    %1054 = vmatmul.bf16.gmra.mxu0 %v240
    %v1055 = vpop.f32.mrf.mxu0
    %v1056 = vadd.f32 %v987, %v1055
    %v1057 = vpop.f32.mrf.mxu0
    %v1058 = vadd.f32 %v989, %v1057
    %1059 = vmatmul.bf16.gmra.mxu0 %v248
    %v1060 = vpop.f32.mrf.mxu0
    %v1061 = vadd.f32 %v992, %v1060
    %v1062 = vpop.f32.mrf.mxu0
    %v1063 = vadd.f32 %v994, %v1062
    %1064 = vmatmul.bf16.gmra.mxu0 %v256
    %v1065 = vpop.f32.mrf.mxu0
    %v1066 = vadd.f32 %v997, %v1065
    %v1067 = vpop.f32.mrf.mxu0
    %v1068 = vadd.f32 %v999, %v1067
    %1069 = vmatmul.bf16.gmra.mxu0 %v264
    %v1070 = vpop.f32.mrf.mxu0
    %v1071 = vadd.f32 %v1002, %v1070
    %v1072 = vpop.f32.mrf.mxu0
    %v1073 = vadd.f32 %v1004, %v1072
    %1074 = vmatmul.bf16.gmra.mxu0 %v272
    %v1075 = vpop.f32.mrf.mxu0
    %v1076 = vadd.f32 %v1007, %v1075
    %v1077 = vpop.f32.mrf.mxu0
    %v1078 = vadd.f32 %v1009, %v1077
    %1079 = vmatmul.bf16.gmra.mxu0 %v280
    %v1080 = vpop.f32.mrf.mxu0
    %v1081 = vadd.f32 %v1012, %v1080
    %v1082 = vpop.f32.mrf.mxu0
    %v1083 = vadd.f32 %v1014, %v1082
    %1084 = vmatmul.bf16.gmra.mxu0 %v288
    %v1085 = vpop.f32.mrf.mxu0
    %v1086 = vadd.f32 %v1017, %v1085
    %v1087 = vpop.f32.mrf.mxu0
    %v1088 = vadd.f32 %v1019, %v1087
    %1089 = vmatmul.bf16.gmra.mxu0 %v296
    %v1090 = vpop.f32.mrf.mxu0
    %v1091 = vadd.f32 %v1022, %v1090
    %v1092 = vpop.f32.mrf.mxu0
    %v1093 = vadd.f32 %v1024, %v1092
    %1094 = vmatmul.bf16.gmra.mxu0 %v304
    %v1095 = vpop.f32.mrf.mxu0
    %v1096 = vadd.f32 %v1027, %v1095
    %v1097 = vpop.f32.mrf.mxu0
    %v1098 = vadd.f32 %v1029, %v1097
    %1099 = vdwg.mxu0
    %1100 = vmatpush.bf16.msra.mxu0 %v645
    %1101 = vmatpush.bf16.msra.mxu0 %v643
    %1102 = vmatpush.bf16.msra.mxu0 %v641
    %1103 = vmatpush.bf16.msra.mxu0 %v639
    %1104 = vmatpush.bf16.msra.mxu0 %v637
    %1105 = vmatpush.bf16.msra.mxu0 %v635
    %1106 = vmatpush.bf16.msra.mxu0 %v633
    %1107 = vmatpush.bf16.msra.mxu0 %v631
    %1108 = vmatmul.bf16.gmra.mxu0 %v217
    %v1109 = vpop.f32.mrf.mxu0
    %v1110 = vadd.f32 %v1041, %v1109
    %v1111 = vpop.f32.mrf.mxu0
    %v1112 = vadd.f32 %v1043, %v1111
    %1113 = vmatmul.bf16.gmra.mxu0 %v225
    %v1114 = vpop.f32.mrf.mxu0
    %v1115 = vadd.f32 %v1046, %v1114
    %v1116 = vpop.f32.mrf.mxu0
    %v1117 = vadd.f32 %v1048, %v1116
    %1118 = vmatmul.bf16.gmra.mxu0 %v233
    %v1119 = vpop.f32.mrf.mxu0
    %v1120 = vadd.f32 %v1051, %v1119
    %v1121 = vpop.f32.mrf.mxu0
    %v1122 = vadd.f32 %v1053, %v1121
    %1123 = vmatmul.bf16.gmra.mxu0 %v241
    %v1124 = vpop.f32.mrf.mxu0
    %v1125 = vadd.f32 %v1056, %v1124
    %v1126 = vpop.f32.mrf.mxu0
    %v1127 = vadd.f32 %v1058, %v1126
    %1128 = vmatmul.bf16.gmra.mxu0 %v249
    %v1129 = vpop.f32.mrf.mxu0
    %v1130 = vadd.f32 %v1061, %v1129
    %v1131 = vpop.f32.mrf.mxu0
    %v1132 = vadd.f32 %v1063, %v1131
    %1133 = vmatmul.bf16.gmra.mxu0 %v257
    %v1134 = vpop.f32.mrf.mxu0
    %v1135 = vadd.f32 %v1066, %v1134
    %v1136 = vpop.f32.mrf.mxu0
    %v1137 = vadd.f32 %v1068, %v1136
    %1138 = vmatmul.bf16.gmra.mxu0 %v265
    %v1139 = vpop.f32.mrf.mxu0
    %v1140 = vadd.f32 %v1071, %v1139
    %v1141 = vpop.f32.mrf.mxu0
    %v1142 = vadd.f32 %v1073, %v1141
    %1143 = vmatmul.bf16.gmra.mxu0 %v273
    %v1144 = vpop.f32.mrf.mxu0
    %v1145 = vadd.f32 %v1076, %v1144
    %v1146 = vpop.f32.mrf.mxu0
    %v1147 = vadd.f32 %v1078, %v1146
    %1148 = vmatmul.bf16.gmra.mxu0 %v281
    %v1149 = vpop.f32.mrf.mxu0
    %v1150 = vadd.f32 %v1081, %v1149
    %v1151 = vpop.f32.mrf.mxu0
    %v1152 = vadd.f32 %v1083, %v1151
    %1153 = vmatmul.bf16.gmra.mxu0 %v289
    %v1154 = vpop.f32.mrf.mxu0
    %v1155 = vadd.f32 %v1086, %v1154
    %v1156 = vpop.f32.mrf.mxu0
    %v1157 = vadd.f32 %v1088, %v1156
    %1158 = vmatmul.bf16.gmra.mxu0 %v297
    %v1159 = vpop.f32.mrf.mxu0
    %v1160 = vadd.f32 %v1091, %v1159
    %v1161 = vpop.f32.mrf.mxu0
    %v1162 = vadd.f32 %v1093, %v1161
    %1163 = vmatmul.bf16.gmra.mxu0 %v305
    %v1164 = vpop.f32.mrf.mxu0
    %v1165 = vadd.f32 %v1096, %v1164
    %v1166 = vpop.f32.mrf.mxu0
    %v1167 = vadd.f32 %v1098, %v1166
    %1168 = vdwg.mxu0
    %1169 = vmatpush.bf16.msra.mxu0 0
    %1170 = vmatpush.bf16.msra.mxu0 0
    %1171 = vmatpush.bf16.msra.mxu0 0
    %1172 = vmatpush.bf16.msra.mxu0 0
    %1173 = vmatpush.bf16.msra.mxu0 0
    %1174 = vmatpush.bf16.msra.mxu0 0
    %1175 = vmatpush.bf16.msra.mxu0 0
    %1176 = vmatpush.bf16.msra.mxu0 %v647
    %1177 = vmatmul.bf16.gmra.mxu0 %v651
    %v1178 = vpop.f32.mrf.mxu0
    %v1179 = vadd.f32 %v1110, %v1178
    %v1180 = vpop.f32.mrf.mxu0
    %v1181 = vadd.f32 %v1112, %v1180
    %1182 = vmatmul.bf16.gmra.mxu0 %v654
    %v1183 = vpop.f32.mrf.mxu0
    %v1184 = vadd.f32 %v1115, %v1183
    %v1185 = vpop.f32.mrf.mxu0
    %v1186 = vadd.f32 %v1117, %v1185
    %1187 = vmatmul.bf16.gmra.mxu0 %v657
    %v1188 = vpop.f32.mrf.mxu0
    %v1189 = vadd.f32 %v1120, %v1188
    %v1190 = vpop.f32.mrf.mxu0
    %v1191 = vadd.f32 %v1122, %v1190
    %1192 = vmatmul.bf16.gmra.mxu0 %v660
    %v1193 = vpop.f32.mrf.mxu0
    %v1194 = vadd.f32 %v1125, %v1193
    %v1195 = vpop.f32.mrf.mxu0
    %v1196 = vadd.f32 %v1127, %v1195
    %1197 = vmatmul.bf16.gmra.mxu0 %v663
    %v1198 = vpop.f32.mrf.mxu0
    %v1199 = vadd.f32 %v1130, %v1198
    %v1200 = vpop.f32.mrf.mxu0
    %v1201 = vadd.f32 %v1132, %v1200
    %1202 = vmatmul.bf16.gmra.mxu0 %v666
    %v1203 = vpop.f32.mrf.mxu0
    %v1204 = vadd.f32 %v1135, %v1203
    %v1205 = vpop.f32.mrf.mxu0
    %v1206 = vadd.f32 %v1137, %v1205
    %1207 = vmatmul.bf16.gmra.mxu0 %v669
    %v1208 = vpop.f32.mrf.mxu0
    %v1209 = vadd.f32 %v1140, %v1208
    %v1210 = vpop.f32.mrf.mxu0
    %v1211 = vadd.f32 %v1142, %v1210
    %1212 = vmatmul.bf16.gmra.mxu0 %v672
    %v1213 = vpop.f32.mrf.mxu0
    %v1214 = vadd.f32 %v1145, %v1213
    %v1215 = vpop.f32.mrf.mxu0
    %v1216 = vadd.f32 %v1147, %v1215
    %1217 = vmatmul.bf16.gmra.mxu0 %v675
    %v1218 = vpop.f32.mrf.mxu0
    %v1219 = vadd.f32 %v1150, %v1218
    %v1220 = vpop.f32.mrf.mxu0
    %v1221 = vadd.f32 %v1152, %v1220
    %1222 = vmatmul.bf16.gmra.mxu0 %v678
    %v1223 = vpop.f32.mrf.mxu0
    %v1224 = vadd.f32 %v1155, %v1223
    %v1225 = vpop.f32.mrf.mxu0
    %v1226 = vadd.f32 %v1157, %v1225
    %1227 = vmatmul.bf16.gmra.mxu0 %v681
    %v1228 = vpop.f32.mrf.mxu0
    %v1229 = vadd.f32 %v1160, %v1228
    %v1230 = vpop.f32.mrf.mxu0
    %v1231 = vadd.f32 %v1162, %v1230
    %1232 = vmatmul.bf16.gmra.mxu0 %v684
    %v1233 = vpop.f32.mrf.mxu0
    %v1234 = vadd.f32 %v1165, %v1233
    %v1235 = vpop.f32.mrf.mxu0
    %v1236 = vadd.f32 %v1167, %v1235
    %1237 = vdwg.mxu0
    %1238 = vmatpush.bf16.msra.mxu0 %v550
    %1239 = vmatpush.bf16.msra.mxu0 %v548
    %1240 = vmatpush.bf16.msra.mxu0 %v546
    %1241 = vmatpush.bf16.msra.mxu0 %v544
    %1242 = vmatpush.bf16.msra.mxu0 %v542
    %1243 = vmatpush.bf16.msra.mxu0 %v540
    %1244 = vmatpush.bf16.msra.mxu0 %v538
    %1245 = vmatpush.bf16.msra.mxu0 %v536
    %1246 = vmatmul.bf16.gmra.mxu0 %v211
    %v1247 = vpop.f32.mrf.mxu0
    %v1248 = vadd.f32 0.0, %v1247
    %v1249 = vpop.f32.mrf.mxu0
    %v1250 = vadd.f32 0.0, %v1249
    %1251 = vmatmul.bf16.gmra.mxu0 %v219
    %v1252 = vpop.f32.mrf.mxu0
    %v1253 = vadd.f32 0.0, %v1252
    %v1254 = vpop.f32.mrf.mxu0
    %v1255 = vadd.f32 0.0, %v1254
    %1256 = vmatmul.bf16.gmra.mxu0 %v227
    %v1257 = vpop.f32.mrf.mxu0
    %v1258 = vadd.f32 0.0, %v1257
    %v1259 = vpop.f32.mrf.mxu0
    %v1260 = vadd.f32 0.0, %v1259
    %1261 = vmatmul.bf16.gmra.mxu0 %v235
    %v1262 = vpop.f32.mrf.mxu0
    %v1263 = vadd.f32 0.0, %v1262
    %v1264 = vpop.f32.mrf.mxu0
    %v1265 = vadd.f32 0.0, %v1264
    %1266 = vmatmul.bf16.gmra.mxu0 %v243
    %v1267 = vpop.f32.mrf.mxu0
    %v1268 = vadd.f32 0.0, %v1267
    %v1269 = vpop.f32.mrf.mxu0
    %v1270 = vadd.f32 0.0, %v1269
    %1271 = vmatmul.bf16.gmra.mxu0 %v251
    %v1272 = vpop.f32.mrf.mxu0
    %v1273 = vadd.f32 0.0, %v1272
    %v1274 = vpop.f32.mrf.mxu0
    %v1275 = vadd.f32 0.0, %v1274
    %1276 = vmatmul.bf16.gmra.mxu0 %v259
    %v1277 = vpop.f32.mrf.mxu0
    %v1278 = vadd.f32 0.0, %v1277
    %v1279 = vpop.f32.mrf.mxu0
    %v1280 = vadd.f32 0.0, %v1279
    %1281 = vmatmul.bf16.gmra.mxu0 %v267
    %v1282 = vpop.f32.mrf.mxu0
    %v1283 = vadd.f32 0.0, %v1282
    %v1284 = vpop.f32.mrf.mxu0
    %v1285 = vadd.f32 0.0, %v1284
    %1286 = vmatmul.bf16.gmra.mxu0 %v275
    %v1287 = vpop.f32.mrf.mxu0
    %v1288 = vadd.f32 0.0, %v1287
    %v1289 = vpop.f32.mrf.mxu0
    %v1290 = vadd.f32 0.0, %v1289
    %1291 = vmatmul.bf16.gmra.mxu0 %v283
    %v1292 = vpop.f32.mrf.mxu0
    %v1293 = vadd.f32 0.0, %v1292
    %v1294 = vpop.f32.mrf.mxu0
    %v1295 = vadd.f32 0.0, %v1294
    %1296 = vmatmul.bf16.gmra.mxu0 %v291
    %v1297 = vpop.f32.mrf.mxu0
    %v1298 = vadd.f32 0.0, %v1297
    %v1299 = vpop.f32.mrf.mxu0
    %v1300 = vadd.f32 0.0, %v1299
    %1301 = vmatmul.bf16.gmra.mxu0 %v299
    %v1302 = vpop.f32.mrf.mxu0
    %v1303 = vadd.f32 0.0, %v1302
    %v1304 = vpop.f32.mrf.mxu0
    %v1305 = vadd.f32 0.0, %v1304
    %1306 = vdwg.mxu0
    %1307 = vmatpush.bf16.msra.mxu0 %v566
    %1308 = vmatpush.bf16.msra.mxu0 %v564
    %1309 = vmatpush.bf16.msra.mxu0 %v562
    %1310 = vmatpush.bf16.msra.mxu0 %v560
    %1311 = vmatpush.bf16.msra.mxu0 %v558
    %1312 = vmatpush.bf16.msra.mxu0 %v556
    %1313 = vmatpush.bf16.msra.mxu0 %v554
    %1314 = vmatpush.bf16.msra.mxu0 %v552
    %1315 = vmatmul.bf16.gmra.mxu0 %v212
    %v1316 = vpop.f32.mrf.mxu0
    %v1317 = vadd.f32 %v1248, %v1316
    %v1318 = vpop.f32.mrf.mxu0
    %v1319 = vadd.f32 %v1250, %v1318
    %1320 = vmatmul.bf16.gmra.mxu0 %v220
    %v1321 = vpop.f32.mrf.mxu0
    %v1322 = vadd.f32 %v1253, %v1321
    %v1323 = vpop.f32.mrf.mxu0
    %v1324 = vadd.f32 %v1255, %v1323
    %1325 = vmatmul.bf16.gmra.mxu0 %v228
    %v1326 = vpop.f32.mrf.mxu0
    %v1327 = vadd.f32 %v1258, %v1326
    %v1328 = vpop.f32.mrf.mxu0
    %v1329 = vadd.f32 %v1260, %v1328
    %1330 = vmatmul.bf16.gmra.mxu0 %v236
    %v1331 = vpop.f32.mrf.mxu0
    %v1332 = vadd.f32 %v1263, %v1331
    %v1333 = vpop.f32.mrf.mxu0
    %v1334 = vadd.f32 %v1265, %v1333
    %1335 = vmatmul.bf16.gmra.mxu0 %v244
    %v1336 = vpop.f32.mrf.mxu0
    %v1337 = vadd.f32 %v1268, %v1336
    %v1338 = vpop.f32.mrf.mxu0
    %v1339 = vadd.f32 %v1270, %v1338
    %1340 = vmatmul.bf16.gmra.mxu0 %v252
    %v1341 = vpop.f32.mrf.mxu0
    %v1342 = vadd.f32 %v1273, %v1341
    %v1343 = vpop.f32.mrf.mxu0
    %v1344 = vadd.f32 %v1275, %v1343
    %1345 = vmatmul.bf16.gmra.mxu0 %v260
    %v1346 = vpop.f32.mrf.mxu0
    %v1347 = vadd.f32 %v1278, %v1346
    %v1348 = vpop.f32.mrf.mxu0
    %v1349 = vadd.f32 %v1280, %v1348
    %1350 = vmatmul.bf16.gmra.mxu0 %v268
    %v1351 = vpop.f32.mrf.mxu0
    %v1352 = vadd.f32 %v1283, %v1351
    %v1353 = vpop.f32.mrf.mxu0
    %v1354 = vadd.f32 %v1285, %v1353
    %1355 = vmatmul.bf16.gmra.mxu0 %v276
    %v1356 = vpop.f32.mrf.mxu0
    %v1357 = vadd.f32 %v1288, %v1356
    %v1358 = vpop.f32.mrf.mxu0
    %v1359 = vadd.f32 %v1290, %v1358
    %1360 = vmatmul.bf16.gmra.mxu0 %v284
    %v1361 = vpop.f32.mrf.mxu0
    %v1362 = vadd.f32 %v1293, %v1361
    %v1363 = vpop.f32.mrf.mxu0
    %v1364 = vadd.f32 %v1295, %v1363
    %1365 = vmatmul.bf16.gmra.mxu0 %v292
    %v1366 = vpop.f32.mrf.mxu0
    %v1367 = vadd.f32 %v1298, %v1366
    %v1368 = vpop.f32.mrf.mxu0
    %v1369 = vadd.f32 %v1300, %v1368
    %1370 = vmatmul.bf16.gmra.mxu0 %v300
    %v1371 = vpop.f32.mrf.mxu0
    %v1372 = vadd.f32 %v1303, %v1371
    %v1373 = vpop.f32.mrf.mxu0
    %v1374 = vadd.f32 %v1305, %v1373
    %1375 = vdwg.mxu0
    %1376 = vmatpush.bf16.msra.mxu0 %v582
    %1377 = vmatpush.bf16.msra.mxu0 %v580
    %1378 = vmatpush.bf16.msra.mxu0 %v578
    %1379 = vmatpush.bf16.msra.mxu0 %v576
    %1380 = vmatpush.bf16.msra.mxu0 %v574
    %1381 = vmatpush.bf16.msra.mxu0 %v572
    %1382 = vmatpush.bf16.msra.mxu0 %v570
    %1383 = vmatpush.bf16.msra.mxu0 %v568
    %1384 = vmatmul.bf16.gmra.mxu0 %v213
    %v1385 = vpop.f32.mrf.mxu0
    %v1386 = vadd.f32 %v1317, %v1385
    %v1387 = vpop.f32.mrf.mxu0
    %v1388 = vadd.f32 %v1319, %v1387
    %1389 = vmatmul.bf16.gmra.mxu0 %v221
    %v1390 = vpop.f32.mrf.mxu0
    %v1391 = vadd.f32 %v1322, %v1390
    %v1392 = vpop.f32.mrf.mxu0
    %v1393 = vadd.f32 %v1324, %v1392
    %1394 = vmatmul.bf16.gmra.mxu0 %v229
    %v1395 = vpop.f32.mrf.mxu0
    %v1396 = vadd.f32 %v1327, %v1395
    %v1397 = vpop.f32.mrf.mxu0
    %v1398 = vadd.f32 %v1329, %v1397
    %1399 = vmatmul.bf16.gmra.mxu0 %v237
    %v1400 = vpop.f32.mrf.mxu0
    %v1401 = vadd.f32 %v1332, %v1400
    %v1402 = vpop.f32.mrf.mxu0
    %v1403 = vadd.f32 %v1334, %v1402
    %1404 = vmatmul.bf16.gmra.mxu0 %v245
    %v1405 = vpop.f32.mrf.mxu0
    %v1406 = vadd.f32 %v1337, %v1405
    %v1407 = vpop.f32.mrf.mxu0
    %v1408 = vadd.f32 %v1339, %v1407
    %1409 = vmatmul.bf16.gmra.mxu0 %v253
    %v1410 = vpop.f32.mrf.mxu0
    %v1411 = vadd.f32 %v1342, %v1410
    %v1412 = vpop.f32.mrf.mxu0
    %v1413 = vadd.f32 %v1344, %v1412
    %1414 = vmatmul.bf16.gmra.mxu0 %v261
    %v1415 = vpop.f32.mrf.mxu0
    %v1416 = vadd.f32 %v1347, %v1415
    %v1417 = vpop.f32.mrf.mxu0
    %v1418 = vadd.f32 %v1349, %v1417
    %1419 = vmatmul.bf16.gmra.mxu0 %v269
    %v1420 = vpop.f32.mrf.mxu0
    %v1421 = vadd.f32 %v1352, %v1420
    %v1422 = vpop.f32.mrf.mxu0
    %v1423 = vadd.f32 %v1354, %v1422
    %1424 = vmatmul.bf16.gmra.mxu0 %v277
    %v1425 = vpop.f32.mrf.mxu0
    %v1426 = vadd.f32 %v1357, %v1425
    %v1427 = vpop.f32.mrf.mxu0
    %v1428 = vadd.f32 %v1359, %v1427
    %1429 = vmatmul.bf16.gmra.mxu0 %v285
    %v1430 = vpop.f32.mrf.mxu0
    %v1431 = vadd.f32 %v1362, %v1430
    %v1432 = vpop.f32.mrf.mxu0
    %v1433 = vadd.f32 %v1364, %v1432
    %1434 = vmatmul.bf16.gmra.mxu0 %v293
    %v1435 = vpop.f32.mrf.mxu0
    %v1436 = vadd.f32 %v1367, %v1435
    %v1437 = vpop.f32.mrf.mxu0
    %v1438 = vadd.f32 %v1369, %v1437
    %1439 = vmatmul.bf16.gmra.mxu0 %v301
    %v1440 = vpop.f32.mrf.mxu0
    %v1441 = vadd.f32 %v1372, %v1440
    %v1442 = vpop.f32.mrf.mxu0
    %v1443 = vadd.f32 %v1374, %v1442
    %1444 = vdwg.mxu0
    %1445 = vmatpush.bf16.msra.mxu0 %v598
    %1446 = vmatpush.bf16.msra.mxu0 %v596
    %1447 = vmatpush.bf16.msra.mxu0 %v594
    %1448 = vmatpush.bf16.msra.mxu0 %v592
    %1449 = vmatpush.bf16.msra.mxu0 %v590
    %1450 = vmatpush.bf16.msra.mxu0 %v588
    %1451 = vmatpush.bf16.msra.mxu0 %v586
    %1452 = vmatpush.bf16.msra.mxu0 %v584
    %1453 = vmatmul.bf16.gmra.mxu0 %v214
    %v1454 = vpop.f32.mrf.mxu0
    %v1455 = vadd.f32 %v1386, %v1454
    %v1456 = vpop.f32.mrf.mxu0
    %v1457 = vadd.f32 %v1388, %v1456
    %1458 = vmatmul.bf16.gmra.mxu0 %v222
    %v1459 = vpop.f32.mrf.mxu0
    %v1460 = vadd.f32 %v1391, %v1459
    %v1461 = vpop.f32.mrf.mxu0
    %v1462 = vadd.f32 %v1393, %v1461
    %1463 = vmatmul.bf16.gmra.mxu0 %v230
    %v1464 = vpop.f32.mrf.mxu0
    %v1465 = vadd.f32 %v1396, %v1464
    %v1466 = vpop.f32.mrf.mxu0
    %v1467 = vadd.f32 %v1398, %v1466
    %1468 = vmatmul.bf16.gmra.mxu0 %v238
    %v1469 = vpop.f32.mrf.mxu0
    %v1470 = vadd.f32 %v1401, %v1469
    %v1471 = vpop.f32.mrf.mxu0
    %v1472 = vadd.f32 %v1403, %v1471
    %1473 = vmatmul.bf16.gmra.mxu0 %v246
    %v1474 = vpop.f32.mrf.mxu0
    %v1475 = vadd.f32 %v1406, %v1474
    %v1476 = vpop.f32.mrf.mxu0
    %v1477 = vadd.f32 %v1408, %v1476
    %1478 = vmatmul.bf16.gmra.mxu0 %v254
    %v1479 = vpop.f32.mrf.mxu0
    %v1480 = vadd.f32 %v1411, %v1479
    %v1481 = vpop.f32.mrf.mxu0
    %v1482 = vadd.f32 %v1413, %v1481
    %1483 = vmatmul.bf16.gmra.mxu0 %v262
    %v1484 = vpop.f32.mrf.mxu0
    %v1485 = vadd.f32 %v1416, %v1484
    %v1486 = vpop.f32.mrf.mxu0
    %v1487 = vadd.f32 %v1418, %v1486
    %1488 = vmatmul.bf16.gmra.mxu0 %v270
    %v1489 = vpop.f32.mrf.mxu0
    %v1490 = vadd.f32 %v1421, %v1489
    %v1491 = vpop.f32.mrf.mxu0
    %v1492 = vadd.f32 %v1423, %v1491
    %1493 = vmatmul.bf16.gmra.mxu0 %v278
    %v1494 = vpop.f32.mrf.mxu0
    %v1495 = vadd.f32 %v1426, %v1494
    %v1496 = vpop.f32.mrf.mxu0
    %v1497 = vadd.f32 %v1428, %v1496
    %1498 = vmatmul.bf16.gmra.mxu0 %v286
    %v1499 = vpop.f32.mrf.mxu0
    %v1500 = vadd.f32 %v1431, %v1499
    %v1501 = vpop.f32.mrf.mxu0
    %v1502 = vadd.f32 %v1433, %v1501
    %1503 = vmatmul.bf16.gmra.mxu0 %v294
    %v1504 = vpop.f32.mrf.mxu0
    %v1505 = vadd.f32 %v1436, %v1504
    %v1506 = vpop.f32.mrf.mxu0
    %v1507 = vadd.f32 %v1438, %v1506
    %1508 = vmatmul.bf16.gmra.mxu0 %v302
    %v1509 = vpop.f32.mrf.mxu0
    %v1510 = vadd.f32 %v1441, %v1509
    %v1511 = vpop.f32.mrf.mxu0
    %v1512 = vadd.f32 %v1443, %v1511
    %1513 = vdwg.mxu0
    %1514 = vmatpush.bf16.msra.mxu0 %v614
    %1515 = vmatpush.bf16.msra.mxu0 %v612
    %1516 = vmatpush.bf16.msra.mxu0 %v610
    %1517 = vmatpush.bf16.msra.mxu0 %v608
    %1518 = vmatpush.bf16.msra.mxu0 %v606
    %1519 = vmatpush.bf16.msra.mxu0 %v604
    %1520 = vmatpush.bf16.msra.mxu0 %v602
    %1521 = vmatpush.bf16.msra.mxu0 %v600
    %1522 = vmatmul.bf16.gmra.mxu0 %v215
    %v1523 = vpop.f32.mrf.mxu0
    %v1524 = vadd.f32 %v1455, %v1523
    %v1525 = vpop.f32.mrf.mxu0
    %v1526 = vadd.f32 %v1457, %v1525
    %1527 = vmatmul.bf16.gmra.mxu0 %v223
    %v1528 = vpop.f32.mrf.mxu0
    %v1529 = vadd.f32 %v1460, %v1528
    %v1530 = vpop.f32.mrf.mxu0
    %v1531 = vadd.f32 %v1462, %v1530
    %1532 = vmatmul.bf16.gmra.mxu0 %v231
    %v1533 = vpop.f32.mrf.mxu0
    %v1534 = vadd.f32 %v1465, %v1533
    %v1535 = vpop.f32.mrf.mxu0
    %v1536 = vadd.f32 %v1467, %v1535
    %1537 = vmatmul.bf16.gmra.mxu0 %v239
    %v1538 = vpop.f32.mrf.mxu0
    %v1539 = vadd.f32 %v1470, %v1538
    %v1540 = vpop.f32.mrf.mxu0
    %v1541 = vadd.f32 %v1472, %v1540
    %1542 = vmatmul.bf16.gmra.mxu0 %v247
    %v1543 = vpop.f32.mrf.mxu0
    %v1544 = vadd.f32 %v1475, %v1543
    %v1545 = vpop.f32.mrf.mxu0
    %v1546 = vadd.f32 %v1477, %v1545
    %1547 = vmatmul.bf16.gmra.mxu0 %v255
    %v1548 = vpop.f32.mrf.mxu0
    %v1549 = vadd.f32 %v1480, %v1548
    %v1550 = vpop.f32.mrf.mxu0
    %v1551 = vadd.f32 %v1482, %v1550
    %1552 = vmatmul.bf16.gmra.mxu0 %v263
    %v1553 = vpop.f32.mrf.mxu0
    %v1554 = vadd.f32 %v1485, %v1553
    %v1555 = vpop.f32.mrf.mxu0
    %v1556 = vadd.f32 %v1487, %v1555
    %1557 = vmatmul.bf16.gmra.mxu0 %v271
    %v1558 = vpop.f32.mrf.mxu0
    %v1559 = vadd.f32 %v1490, %v1558
    %v1560 = vpop.f32.mrf.mxu0
    %v1561 = vadd.f32 %v1492, %v1560
    %1562 = vmatmul.bf16.gmra.mxu0 %v279
    %v1563 = vpop.f32.mrf.mxu0
    %v1564 = vadd.f32 %v1495, %v1563
    %v1565 = vpop.f32.mrf.mxu0
    %v1566 = vadd.f32 %v1497, %v1565
    %1567 = vmatmul.bf16.gmra.mxu0 %v287
    %v1568 = vpop.f32.mrf.mxu0
    %v1569 = vadd.f32 %v1500, %v1568
    %v1570 = vpop.f32.mrf.mxu0
    %v1571 = vadd.f32 %v1502, %v1570
    %1572 = vmatmul.bf16.gmra.mxu0 %v295
    %v1573 = vpop.f32.mrf.mxu0
    %v1574 = vadd.f32 %v1505, %v1573
    %v1575 = vpop.f32.mrf.mxu0
    %v1576 = vadd.f32 %v1507, %v1575
    %1577 = vmatmul.bf16.gmra.mxu0 %v303
    %v1578 = vpop.f32.mrf.mxu0
    %v1579 = vadd.f32 %v1510, %v1578
    %v1580 = vpop.f32.mrf.mxu0
    %v1581 = vadd.f32 %v1512, %v1580
    %1582 = vdwg.mxu0
    %1583 = vmatpush.bf16.msra.mxu0 %v630
    %1584 = vmatpush.bf16.msra.mxu0 %v628
    %1585 = vmatpush.bf16.msra.mxu0 %v626
    %1586 = vmatpush.bf16.msra.mxu0 %v624
    %1587 = vmatpush.bf16.msra.mxu0 %v622
    %1588 = vmatpush.bf16.msra.mxu0 %v620
    %1589 = vmatpush.bf16.msra.mxu0 %v618
    %1590 = vmatpush.bf16.msra.mxu0 %v616
    %1591 = vmatmul.bf16.gmra.mxu0 %v216
    %v1592 = vpop.f32.mrf.mxu0
    %v1593 = vadd.f32 %v1524, %v1592
    %v1594 = vpop.f32.mrf.mxu0
    %v1595 = vadd.f32 %v1526, %v1594
    %1596 = vmatmul.bf16.gmra.mxu0 %v224
    %v1597 = vpop.f32.mrf.mxu0
    %v1598 = vadd.f32 %v1529, %v1597
    %v1599 = vpop.f32.mrf.mxu0
    %v1600 = vadd.f32 %v1531, %v1599
    %1601 = vmatmul.bf16.gmra.mxu0 %v232
    %v1602 = vpop.f32.mrf.mxu0
    %v1603 = vadd.f32 %v1534, %v1602
    %v1604 = vpop.f32.mrf.mxu0
    %v1605 = vadd.f32 %v1536, %v1604
    %1606 = vmatmul.bf16.gmra.mxu0 %v240
    %v1607 = vpop.f32.mrf.mxu0
    %v1608 = vadd.f32 %v1539, %v1607
    %v1609 = vpop.f32.mrf.mxu0
    %v1610 = vadd.f32 %v1541, %v1609
    %1611 = vmatmul.bf16.gmra.mxu0 %v248
    %v1612 = vpop.f32.mrf.mxu0
    %v1613 = vadd.f32 %v1544, %v1612
    %v1614 = vpop.f32.mrf.mxu0
    %v1615 = vadd.f32 %v1546, %v1614
    %1616 = vmatmul.bf16.gmra.mxu0 %v256
    %v1617 = vpop.f32.mrf.mxu0
    %v1618 = vadd.f32 %v1549, %v1617
    %v1619 = vpop.f32.mrf.mxu0
    %v1620 = vadd.f32 %v1551, %v1619
    %1621 = vmatmul.bf16.gmra.mxu0 %v264
    %v1622 = vpop.f32.mrf.mxu0
    %v1623 = vadd.f32 %v1554, %v1622
    %v1624 = vpop.f32.mrf.mxu0
    %v1625 = vadd.f32 %v1556, %v1624
    %1626 = vmatmul.bf16.gmra.mxu0 %v272
    %v1627 = vpop.f32.mrf.mxu0
    %v1628 = vadd.f32 %v1559, %v1627
    %v1629 = vpop.f32.mrf.mxu0
    %v1630 = vadd.f32 %v1561, %v1629
    %1631 = vmatmul.bf16.gmra.mxu0 %v280
    %v1632 = vpop.f32.mrf.mxu0
    %v1633 = vadd.f32 %v1564, %v1632
    %v1634 = vpop.f32.mrf.mxu0
    %v1635 = vadd.f32 %v1566, %v1634
    %1636 = vmatmul.bf16.gmra.mxu0 %v288
    %v1637 = vpop.f32.mrf.mxu0
    %v1638 = vadd.f32 %v1569, %v1637
    %v1639 = vpop.f32.mrf.mxu0
    %v1640 = vadd.f32 %v1571, %v1639
    %1641 = vmatmul.bf16.gmra.mxu0 %v296
    %v1642 = vpop.f32.mrf.mxu0
    %v1643 = vadd.f32 %v1574, %v1642
    %v1644 = vpop.f32.mrf.mxu0
    %v1645 = vadd.f32 %v1576, %v1644
    %1646 = vmatmul.bf16.gmra.mxu0 %v304
    %v1647 = vpop.f32.mrf.mxu0
    %v1648 = vadd.f32 %v1579, %v1647
    %v1649 = vpop.f32.mrf.mxu0
    %v1650 = vadd.f32 %v1581, %v1649
    %1651 = vdwg.mxu0
    %1652 = vmatpush.bf16.msra.mxu0 %v646
    %1653 = vmatpush.bf16.msra.mxu0 %v644
    %1654 = vmatpush.bf16.msra.mxu0 %v642
    %1655 = vmatpush.bf16.msra.mxu0 %v640
    %1656 = vmatpush.bf16.msra.mxu0 %v638
    %1657 = vmatpush.bf16.msra.mxu0 %v636
    %1658 = vmatpush.bf16.msra.mxu0 %v634
    %1659 = vmatpush.bf16.msra.mxu0 %v632
    %1660 = vmatmul.bf16.gmra.mxu0 %v217
    %v1661 = vpop.f32.mrf.mxu0
    %v1662 = vadd.f32 %v1593, %v1661
    %v1663 = vpop.f32.mrf.mxu0
    %v1664 = vadd.f32 %v1595, %v1663
    %1665 = vmatmul.bf16.gmra.mxu0 %v225
    %v1666 = vpop.f32.mrf.mxu0
    %v1667 = vadd.f32 %v1598, %v1666
    %v1668 = vpop.f32.mrf.mxu0
    %v1669 = vadd.f32 %v1600, %v1668
    %1670 = vmatmul.bf16.gmra.mxu0 %v233
    %v1671 = vpop.f32.mrf.mxu0
    %v1672 = vadd.f32 %v1603, %v1671
    %v1673 = vpop.f32.mrf.mxu0
    %v1674 = vadd.f32 %v1605, %v1673
    %1675 = vmatmul.bf16.gmra.mxu0 %v241
    %v1676 = vpop.f32.mrf.mxu0
    %v1677 = vadd.f32 %v1608, %v1676
    %v1678 = vpop.f32.mrf.mxu0
    %v1679 = vadd.f32 %v1610, %v1678
    %1680 = vmatmul.bf16.gmra.mxu0 %v249
    %v1681 = vpop.f32.mrf.mxu0
    %v1682 = vadd.f32 %v1613, %v1681
    %v1683 = vpop.f32.mrf.mxu0
    %v1684 = vadd.f32 %v1615, %v1683
    %1685 = vmatmul.bf16.gmra.mxu0 %v257
    %v1686 = vpop.f32.mrf.mxu0
    %v1687 = vadd.f32 %v1618, %v1686
    %v1688 = vpop.f32.mrf.mxu0
    %v1689 = vadd.f32 %v1620, %v1688
    %1690 = vmatmul.bf16.gmra.mxu0 %v265
    %v1691 = vpop.f32.mrf.mxu0
    %v1692 = vadd.f32 %v1623, %v1691
    %v1693 = vpop.f32.mrf.mxu0
    %v1694 = vadd.f32 %v1625, %v1693
    %1695 = vmatmul.bf16.gmra.mxu0 %v273
    %v1696 = vpop.f32.mrf.mxu0
    %v1697 = vadd.f32 %v1628, %v1696
    %v1698 = vpop.f32.mrf.mxu0
    %v1699 = vadd.f32 %v1630, %v1698
    %1700 = vmatmul.bf16.gmra.mxu0 %v281
    %v1701 = vpop.f32.mrf.mxu0
    %v1702 = vadd.f32 %v1633, %v1701
    %v1703 = vpop.f32.mrf.mxu0
    %v1704 = vadd.f32 %v1635, %v1703
    %1705 = vmatmul.bf16.gmra.mxu0 %v289
    %v1706 = vpop.f32.mrf.mxu0
    %v1707 = vadd.f32 %v1638, %v1706
    %v1708 = vpop.f32.mrf.mxu0
    %v1709 = vadd.f32 %v1640, %v1708
    %1710 = vmatmul.bf16.gmra.mxu0 %v297
    %v1711 = vpop.f32.mrf.mxu0
    %v1712 = vadd.f32 %v1643, %v1711
    %v1713 = vpop.f32.mrf.mxu0
    %v1714 = vadd.f32 %v1645, %v1713
    %1715 = vmatmul.bf16.gmra.mxu0 %v305
    %v1716 = vpop.f32.mrf.mxu0
    %v1717 = vadd.f32 %v1648, %v1716
    %v1718 = vpop.f32.mrf.mxu0
    %v1719 = vadd.f32 %v1650, %v1718
    %1720 = vdwg.mxu0
    %1721 = vmatpush.bf16.msra.mxu0 0
    %1722 = vmatpush.bf16.msra.mxu0 0
    %1723 = vmatpush.bf16.msra.mxu0 0
    %1724 = vmatpush.bf16.msra.mxu0 0
    %1725 = vmatpush.bf16.msra.mxu0 0
    %1726 = vmatpush.bf16.msra.mxu0 0
    %1727 = vmatpush.bf16.msra.mxu0 0
    %1728 = vmatpush.bf16.msra.mxu0 %v648
    %1729 = vmatmul.bf16.gmra.mxu0 %v651
    %v1730 = vpop.f32.mrf.mxu0
    %v1731 = vadd.f32 %v1662, %v1730
    %v1732 = vpop.f32.mrf.mxu0
    %v1733 = vadd.f32 %v1664, %v1732
    %1734 = vmatmul.bf16.gmra.mxu0 %v654
    %v1735 = vpop.f32.mrf.mxu0
    %v1736 = vadd.f32 %v1667, %v1735
    %v1737 = vpop.f32.mrf.mxu0
    %v1738 = vadd.f32 %v1669, %v1737
    %1739 = vmatmul.bf16.gmra.mxu0 %v657
    %v1740 = vpop.f32.mrf.mxu0
    %v1741 = vadd.f32 %v1672, %v1740
    %v1742 = vpop.f32.mrf.mxu0
    %v1743 = vadd.f32 %v1674, %v1742
    %1744 = vmatmul.bf16.gmra.mxu0 %v660
    %v1745 = vpop.f32.mrf.mxu0
    %v1746 = vadd.f32 %v1677, %v1745
    %v1747 = vpop.f32.mrf.mxu0
    %v1748 = vadd.f32 %v1679, %v1747
    %1749 = vmatmul.bf16.gmra.mxu0 %v663
    %v1750 = vpop.f32.mrf.mxu0
    %v1751 = vadd.f32 %v1682, %v1750
    %v1752 = vpop.f32.mrf.mxu0
    %v1753 = vadd.f32 %v1684, %v1752
    %1754 = vmatmul.bf16.gmra.mxu0 %v666
    %v1755 = vpop.f32.mrf.mxu0
    %v1756 = vadd.f32 %v1687, %v1755
    %v1757 = vpop.f32.mrf.mxu0
    %v1758 = vadd.f32 %v1689, %v1757
    %1759 = vmatmul.bf16.gmra.mxu0 %v669
    %v1760 = vpop.f32.mrf.mxu0
    %v1761 = vadd.f32 %v1692, %v1760
    %v1762 = vpop.f32.mrf.mxu0
    %v1763 = vadd.f32 %v1694, %v1762
    %1764 = vmatmul.bf16.gmra.mxu0 %v672
    %v1765 = vpop.f32.mrf.mxu0
    %v1766 = vadd.f32 %v1697, %v1765
    %v1767 = vpop.f32.mrf.mxu0
    %v1768 = vadd.f32 %v1699, %v1767
    %1769 = vmatmul.bf16.gmra.mxu0 %v675
    %v1770 = vpop.f32.mrf.mxu0
    %v1771 = vadd.f32 %v1702, %v1770
    %v1772 = vpop.f32.mrf.mxu0
    %v1773 = vadd.f32 %v1704, %v1772
    %1774 = vmatmul.bf16.gmra.mxu0 %v678
    %v1775 = vpop.f32.mrf.mxu0
    %v1776 = vadd.f32 %v1707, %v1775
    %v1777 = vpop.f32.mrf.mxu0
    %v1778 = vadd.f32 %v1709, %v1777
    %1779 = vmatmul.bf16.gmra.mxu0 %v681
    %v1780 = vpop.f32.mrf.mxu0
    %v1781 = vadd.f32 %v1712, %v1780
    %v1782 = vpop.f32.mrf.mxu0
    %v1783 = vadd.f32 %v1714, %v1782
    %1784 = vmatmul.bf16.gmra.mxu0 %v684
    %v1785 = vpop.f32.mrf.mxu0
    %v1786 = vadd.f32 %v1717, %v1785
    %v1787 = vpop.f32.mrf.mxu0
    %v1788 = vadd.f32 %v1719, %v1787
    %1789 = vdwg.mxu0
    %vm1790 = vcmask 556032
    %v1791 = vsel %vm1790, %v1731, 0.0
    %v1792 = vadd.f32 %v1179, %v1791
    %1793 = vadd.xlane.f32.xlu0 %v1792
    %v1794 = vpop.xlane.xlu0 %1793
    %v1795 = vsel %vm1790, %v1733, 0.0
    %v1796 = vadd.f32 %v1181, %v1795
    %1797 = vadd.xlane.f32.xlu0 %v1796
    %v1798 = vpop.xlane.xlu0 %1797
    %v1799 = vsel %vm1790, %v1736, 0.0
    %v1800 = vadd.f32 %v1184, %v1799
    %1801 = vadd.xlane.f32.xlu0 %v1800
    %v1802 = vpop.xlane.xlu0 %1801
    %v1803 = vsel %vm1790, %v1738, 0.0
    %v1804 = vadd.f32 %v1186, %v1803
    %1805 = vadd.xlane.f32.xlu0 %v1804
    %v1806 = vpop.xlane.xlu0 %1805
    %v1807 = vsel %vm1790, %v1741, 0.0
    %v1808 = vadd.f32 %v1189, %v1807
    %1809 = vadd.xlane.f32.xlu0 %v1808
    %v1810 = vpop.xlane.xlu0 %1809
    %v1811 = vsel %vm1790, %v1743, 0.0
    %v1812 = vadd.f32 %v1191, %v1811
    %1813 = vadd.xlane.f32.xlu0 %v1812
    %v1814 = vpop.xlane.xlu0 %1813
    %v1815 = vsel %vm1790, %v1746, 0.0
    %v1816 = vadd.f32 %v1194, %v1815
    %1817 = vadd.xlane.f32.xlu0 %v1816
    %v1818 = vpop.xlane.xlu0 %1817
    %v1819 = vsel %vm1790, %v1748, 0.0
    %v1820 = vadd.f32 %v1196, %v1819
    %1821 = vadd.xlane.f32.xlu0 %v1820
    %v1822 = vpop.xlane.xlu0 %1821
    %v1823 = vsel %vm1790, %v1751, 0.0
    %v1824 = vadd.f32 %v1199, %v1823
    %1825 = vadd.xlane.f32.xlu0 %v1824
    %v1826 = vpop.xlane.xlu0 %1825
    %v1827 = vsel %vm1790, %v1753, 0.0
    %v1828 = vadd.f32 %v1201, %v1827
    %1829 = vadd.xlane.f32.xlu0 %v1828
    %v1830 = vpop.xlane.xlu0 %1829
    %v1831 = vsel %vm1790, %v1756, 0.0
    %v1832 = vadd.f32 %v1204, %v1831
    %1833 = vadd.xlane.f32.xlu0 %v1832
    %v1834 = vpop.xlane.xlu0 %1833
    %v1835 = vsel %vm1790, %v1758, 0.0
    %v1836 = vadd.f32 %v1206, %v1835
    %1837 = vadd.xlane.f32.xlu0 %v1836
    %v1838 = vpop.xlane.xlu0 %1837
    %v1839 = vsel %vm1790, %v1761, 0.0
    %v1840 = vadd.f32 %v1209, %v1839
    %1841 = vadd.xlane.f32.xlu0 %v1840
    %v1842 = vpop.xlane.xlu0 %1841
    %v1843 = vsel %vm1790, %v1763, 0.0
    %v1844 = vadd.f32 %v1211, %v1843
    %1845 = vadd.xlane.f32.xlu0 %v1844
    %v1846 = vpop.xlane.xlu0 %1845
    %v1847 = vsel %vm1790, %v1766, 0.0
    %v1848 = vadd.f32 %v1214, %v1847
    %1849 = vadd.xlane.f32.xlu0 %v1848
    %v1850 = vpop.xlane.xlu0 %1849
    %v1851 = vsel %vm1790, %v1768, 0.0
    %v1852 = vadd.f32 %v1216, %v1851
    %1853 = vadd.xlane.f32.xlu0 %v1852
    %v1854 = vpop.xlane.xlu0 %1853
    %v1855 = vsel %vm1790, %v1771, 0.0
    %v1856 = vadd.f32 %v1219, %v1855
    %1857 = vadd.xlane.f32.xlu0 %v1856
    %v1858 = vpop.xlane.xlu0 %1857
    %v1859 = vsel %vm1790, %v1773, 0.0
    %v1860 = vadd.f32 %v1221, %v1859
    %1861 = vadd.xlane.f32.xlu0 %v1860
    %v1862 = vpop.xlane.xlu0 %1861
    %v1863 = vsel %vm1790, %v1776, 0.0
    %v1864 = vadd.f32 %v1224, %v1863
    %1865 = vadd.xlane.f32.xlu0 %v1864
    %v1866 = vpop.xlane.xlu0 %1865
    %v1867 = vsel %vm1790, %v1778, 0.0
    %v1868 = vadd.f32 %v1226, %v1867
    %1869 = vadd.xlane.f32.xlu0 %v1868
    %v1870 = vpop.xlane.xlu0 %1869
    %v1871 = vsel %vm1790, %v1781, 0.0
    %v1872 = vadd.f32 %v1229, %v1871
    %1873 = vadd.xlane.f32.xlu0 %v1872
    %v1874 = vpop.xlane.xlu0 %1873
    %v1875 = vsel %vm1790, %v1783, 0.0
    %v1876 = vadd.f32 %v1231, %v1875
    %1877 = vadd.xlane.f32.xlu0 %v1876
    %v1878 = vpop.xlane.xlu0 %1877
    %v1879 = vsel %vm1790, %v1786, 0.0
    %v1880 = vadd.f32 %v1234, %v1879
    %1881 = vadd.xlane.f32.xlu0 %v1880
    %v1882 = vpop.xlane.xlu0 %1881
    %v1883 = vsel %vm1790, %v1788, 0.0
    %v1884 = vadd.f32 %v1236, %v1883
    %1885 = vadd.xlane.f32.xlu0 %v1884
    %v1886 = vpop.xlane.xlu0 %1885
    %v1887 = vmul.f32 %v1794, 0.0051020407
    %v1888 = vmul.f32 %v1798, 0.0051020407
    %v1889 = vmul.f32 %v1802, 0.0051020407
    %v1890 = vmul.f32 %v1806, 0.0051020407
    %v1891 = vmul.f32 %v1810, 0.0051020407
    %v1892 = vmul.f32 %v1814, 0.0051020407
    %v1893 = vmul.f32 %v1818, 0.0051020407
    %v1894 = vmul.f32 %v1822, 0.0051020407
    %v1895 = vmul.f32 %v1826, 0.0051020407
    %v1896 = vmul.f32 %v1830, 0.0051020407
    %v1897 = vmul.f32 %v1834, 0.0051020407
    %v1898 = vmul.f32 %v1838, 0.0051020407
    %v1899 = vmul.f32 %v1842, 0.0051020407
    %v1900 = vmul.f32 %v1846, 0.0051020407
    %v1901 = vmul.f32 %v1850, 0.0051020407
    %v1902 = vmul.f32 %v1854, 0.0051020407
    %v1903 = vmul.f32 %v1858, 0.0051020407
    %v1904 = vmul.f32 %v1862, 0.0051020407
    %v1905 = vmul.f32 %v1866, 0.0051020407
    %v1906 = vmul.f32 %v1870, 0.0051020407
    %v1907 = vmul.f32 %v1874, 0.0051020407
    %v1908 = vmul.f32 %v1878, 0.0051020407
    %v1909 = vmul.f32 %v1882, 0.0051020407
    %v1910 = vmul.f32 %v1886, 0.0051020407
    %v1911 = vsub.f32 %v1179, %v1887
    %v1912 = vsub.f32 %v1731, %v1887
    %v1913 = vsub.f32 %v1181, %v1888
    %v1914 = vsub.f32 %v1733, %v1888
    %v1915 = vsub.f32 %v1184, %v1889
    %v1916 = vsub.f32 %v1736, %v1889
    %v1917 = vsub.f32 %v1186, %v1890
    %v1918 = vsub.f32 %v1738, %v1890
    %v1919 = vsub.f32 %v1189, %v1891
    %v1920 = vsub.f32 %v1741, %v1891
    %v1921 = vsub.f32 %v1191, %v1892
    %v1922 = vsub.f32 %v1743, %v1892
    %v1923 = vsub.f32 %v1194, %v1893
    %v1924 = vsub.f32 %v1746, %v1893
    %v1925 = vsub.f32 %v1196, %v1894
    %v1926 = vsub.f32 %v1748, %v1894
    %v1927 = vsub.f32 %v1199, %v1895
    %v1928 = vsub.f32 %v1751, %v1895
    %v1929 = vsub.f32 %v1201, %v1896
    %v1930 = vsub.f32 %v1753, %v1896
    %v1931 = vsub.f32 %v1204, %v1897
    %v1932 = vsub.f32 %v1756, %v1897
    %v1933 = vsub.f32 %v1206, %v1898
    %v1934 = vsub.f32 %v1758, %v1898
    %v1935 = vsub.f32 %v1209, %v1899
    %v1936 = vsub.f32 %v1761, %v1899
    %v1937 = vsub.f32 %v1211, %v1900
    %v1938 = vsub.f32 %v1763, %v1900
    %v1939 = vsub.f32 %v1214, %v1901
    %v1940 = vsub.f32 %v1766, %v1901
    %v1941 = vsub.f32 %v1216, %v1902
    %v1942 = vsub.f32 %v1768, %v1902
    %v1943 = vsub.f32 %v1219, %v1903
    %v1944 = vsub.f32 %v1771, %v1903
    %v1945 = vsub.f32 %v1221, %v1904
    %v1946 = vsub.f32 %v1773, %v1904
    %v1947 = vsub.f32 %v1224, %v1905
    %v1948 = vsub.f32 %v1776, %v1905
    %v1949 = vsub.f32 %v1226, %v1906
    %v1950 = vsub.f32 %v1778, %v1906
    %v1951 = vsub.f32 %v1229, %v1907
    %v1952 = vsub.f32 %v1781, %v1907
    %v1953 = vsub.f32 %v1231, %v1908
    %v1954 = vsub.f32 %v1783, %v1908
    %v1955 = vsub.f32 %v1234, %v1909
    %v1956 = vsub.f32 %v1786, %v1909
    %v1957 = vsub.f32 %v1236, %v1910
    %v1958 = vsub.f32 %v1788, %v1910
    %v1959 = vmul.f32 %v1911, %v1911
    %v1960 = vmul.f32 %v1912, %v1912
    %v1961 = vmul.f32 %v1913, %v1913
    %v1962 = vmul.f32 %v1914, %v1914
    %v1963 = vmul.f32 %v1915, %v1915
    %v1964 = vmul.f32 %v1916, %v1916
    %v1965 = vmul.f32 %v1917, %v1917
    %v1966 = vmul.f32 %v1918, %v1918
    %v1967 = vmul.f32 %v1919, %v1919
    %v1968 = vmul.f32 %v1920, %v1920
    %v1969 = vmul.f32 %v1921, %v1921
    %v1970 = vmul.f32 %v1922, %v1922
    %v1971 = vmul.f32 %v1923, %v1923
    %v1972 = vmul.f32 %v1924, %v1924
    %v1973 = vmul.f32 %v1925, %v1925
    %v1974 = vmul.f32 %v1926, %v1926
    %v1975 = vmul.f32 %v1927, %v1927
    %v1976 = vmul.f32 %v1928, %v1928
    %v1977 = vmul.f32 %v1929, %v1929
    %v1978 = vmul.f32 %v1930, %v1930
    %v1979 = vmul.f32 %v1931, %v1931
    %v1980 = vmul.f32 %v1932, %v1932
    %v1981 = vmul.f32 %v1933, %v1933
    %v1982 = vmul.f32 %v1934, %v1934
    %v1983 = vmul.f32 %v1935, %v1935
    %v1984 = vmul.f32 %v1936, %v1936
    %v1985 = vmul.f32 %v1937, %v1937
    %v1986 = vmul.f32 %v1938, %v1938
    %v1987 = vmul.f32 %v1939, %v1939
    %v1988 = vmul.f32 %v1940, %v1940
    %v1989 = vmul.f32 %v1941, %v1941
    %v1990 = vmul.f32 %v1942, %v1942
    %v1991 = vmul.f32 %v1943, %v1943
    %v1992 = vmul.f32 %v1944, %v1944
    %v1993 = vmul.f32 %v1945, %v1945
    %v1994 = vmul.f32 %v1946, %v1946
    %v1995 = vmul.f32 %v1947, %v1947
    %v1996 = vmul.f32 %v1948, %v1948
    %v1997 = vmul.f32 %v1949, %v1949
    %v1998 = vmul.f32 %v1950, %v1950
    %v1999 = vmul.f32 %v1951, %v1951
    %v2000 = vmul.f32 %v1952, %v1952
    %v2001 = vmul.f32 %v1953, %v1953
    %v2002 = vmul.f32 %v1954, %v1954
    %v2003 = vmul.f32 %v1955, %v1955
    %v2004 = vmul.f32 %v1956, %v1956
    %v2005 = vmul.f32 %v1957, %v1957
    %v2006 = vmul.f32 %v1958, %v1958
    %v2007 = vsel %vm1790, %v1960, 0.0
    %v2008 = vadd.f32 %v1959, %v2007
    %2009 = vadd.xlane.f32.xlu0 %v2008
    %v2010 = vpop.xlane.xlu0 %2009
    %v2011 = vsel %vm1790, %v1962, 0.0
    %v2012 = vadd.f32 %v1961, %v2011
    %2013 = vadd.xlane.f32.xlu0 %v2012
    %v2014 = vpop.xlane.xlu0 %2013
    %v2015 = vsel %vm1790, %v1964, 0.0
    %v2016 = vadd.f32 %v1963, %v2015
    %2017 = vadd.xlane.f32.xlu0 %v2016
    %v2018 = vpop.xlane.xlu0 %2017
    %v2019 = vsel %vm1790, %v1966, 0.0
    %v2020 = vadd.f32 %v1965, %v2019
    %2021 = vadd.xlane.f32.xlu0 %v2020
    %v2022 = vpop.xlane.xlu0 %2021
    %v2023 = vsel %vm1790, %v1968, 0.0
    %v2024 = vadd.f32 %v1967, %v2023
    %2025 = vadd.xlane.f32.xlu0 %v2024
    %v2026 = vpop.xlane.xlu0 %2025
    %v2027 = vsel %vm1790, %v1970, 0.0
    %v2028 = vadd.f32 %v1969, %v2027
    %2029 = vadd.xlane.f32.xlu0 %v2028
    %v2030 = vpop.xlane.xlu0 %2029
    %v2031 = vsel %vm1790, %v1972, 0.0
    %v2032 = vadd.f32 %v1971, %v2031
    %2033 = vadd.xlane.f32.xlu0 %v2032
    %v2034 = vpop.xlane.xlu0 %2033
    %v2035 = vsel %vm1790, %v1974, 0.0
    %v2036 = vadd.f32 %v1973, %v2035
    %2037 = vadd.xlane.f32.xlu0 %v2036
    %v2038 = vpop.xlane.xlu0 %2037
    %v2039 = vsel %vm1790, %v1976, 0.0
    %v2040 = vadd.f32 %v1975, %v2039
    %2041 = vadd.xlane.f32.xlu0 %v2040
    %v2042 = vpop.xlane.xlu0 %2041
    %v2043 = vsel %vm1790, %v1978, 0.0
    %v2044 = vadd.f32 %v1977, %v2043
    %2045 = vadd.xlane.f32.xlu0 %v2044
    %v2046 = vpop.xlane.xlu0 %2045
    %v2047 = vsel %vm1790, %v1980, 0.0
    %v2048 = vadd.f32 %v1979, %v2047
    %2049 = vadd.xlane.f32.xlu0 %v2048
    %v2050 = vpop.xlane.xlu0 %2049
    %v2051 = vsel %vm1790, %v1982, 0.0
    %v2052 = vadd.f32 %v1981, %v2051
    %2053 = vadd.xlane.f32.xlu0 %v2052
    %v2054 = vpop.xlane.xlu0 %2053
    %v2055 = vsel %vm1790, %v1984, 0.0
    %v2056 = vadd.f32 %v1983, %v2055
    %2057 = vadd.xlane.f32.xlu0 %v2056
    %v2058 = vpop.xlane.xlu0 %2057
    %v2059 = vsel %vm1790, %v1986, 0.0
    %v2060 = vadd.f32 %v1985, %v2059
    %2061 = vadd.xlane.f32.xlu0 %v2060
    %v2062 = vpop.xlane.xlu0 %2061
    %v2063 = vsel %vm1790, %v1988, 0.0
    %v2064 = vadd.f32 %v1987, %v2063
    %2065 = vadd.xlane.f32.xlu0 %v2064
    %v2066 = vpop.xlane.xlu0 %2065
    %v2067 = vsel %vm1790, %v1990, 0.0
    %v2068 = vadd.f32 %v1989, %v2067
    %2069 = vadd.xlane.f32.xlu0 %v2068
    %v2070 = vpop.xlane.xlu0 %2069
    %v2071 = vsel %vm1790, %v1992, 0.0
    %v2072 = vadd.f32 %v1991, %v2071
    %2073 = vadd.xlane.f32.xlu0 %v2072
    %v2074 = vpop.xlane.xlu0 %2073
    %v2075 = vsel %vm1790, %v1994, 0.0
    %v2076 = vadd.f32 %v1993, %v2075
    %2077 = vadd.xlane.f32.xlu0 %v2076
    %v2078 = vpop.xlane.xlu0 %2077
    %v2079 = vsel %vm1790, %v1996, 0.0
    %v2080 = vadd.f32 %v1995, %v2079
    %2081 = vadd.xlane.f32.xlu0 %v2080
    %v2082 = vpop.xlane.xlu0 %2081
    %v2083 = vsel %vm1790, %v1998, 0.0
    %v2084 = vadd.f32 %v1997, %v2083
    %2085 = vadd.xlane.f32.xlu0 %v2084
    %v2086 = vpop.xlane.xlu0 %2085
    %v2087 = vsel %vm1790, %v2000, 0.0
    %v2088 = vadd.f32 %v1999, %v2087
    %2089 = vadd.xlane.f32.xlu0 %v2088
    %v2090 = vpop.xlane.xlu0 %2089
    %v2091 = vsel %vm1790, %v2002, 0.0
    %v2092 = vadd.f32 %v2001, %v2091
    %2093 = vadd.xlane.f32.xlu0 %v2092
    %v2094 = vpop.xlane.xlu0 %2093
    %v2095 = vsel %vm1790, %v2004, 0.0
    %v2096 = vadd.f32 %v2003, %v2095
    %2097 = vadd.xlane.f32.xlu0 %v2096
    %v2098 = vpop.xlane.xlu0 %2097
    %v2099 = vsel %vm1790, %v2006, 0.0
    %v2100 = vadd.f32 %v2005, %v2099
    %2101 = vadd.xlane.f32.xlu0 %v2100
    %v2102 = vpop.xlane.xlu0 %2101
    %v2103 = vmul.f32 %v2010, 0.0051020407
    %v2104 = vmul.f32 %v2014, 0.0051020407
    %v2105 = vmul.f32 %v2018, 0.0051020407
    %v2106 = vmul.f32 %v2022, 0.0051020407
    %v2107 = vmul.f32 %v2026, 0.0051020407
    %v2108 = vmul.f32 %v2030, 0.0051020407
    %v2109 = vmul.f32 %v2034, 0.0051020407
    %v2110 = vmul.f32 %v2038, 0.0051020407
    %v2111 = vmul.f32 %v2042, 0.0051020407
    %v2112 = vmul.f32 %v2046, 0.0051020407
    %v2113 = vmul.f32 %v2050, 0.0051020407
    %v2114 = vmul.f32 %v2054, 0.0051020407
    %v2115 = vmul.f32 %v2058, 0.0051020407
    %v2116 = vmul.f32 %v2062, 0.0051020407
    %v2117 = vmul.f32 %v2066, 0.0051020407
    %v2118 = vmul.f32 %v2070, 0.0051020407
    %v2119 = vmul.f32 %v2074, 0.0051020407
    %v2120 = vmul.f32 %v2078, 0.0051020407
    %v2121 = vmul.f32 %v2082, 0.0051020407
    %v2122 = vmul.f32 %v2086, 0.0051020407
    %v2123 = vmul.f32 %v2090, 0.0051020407
    %v2124 = vmul.f32 %v2094, 0.0051020407
    %v2125 = vmul.f32 %v2098, 0.0051020407
    %v2126 = vmul.f32 %v2102, 0.0051020407
    %v2127 = vld [vmem:[%s2] sm:$0xff]
    %v2128 = vld [vmem:[%s2 + $0x8] sm:$0xff]
    %v2129 = vld [vmem:[%s2 + $0x10] sm:$0xff]
    %v2130 = vld [vmem:[%s2 + $0x18] sm:$0xff]
    %v2131 = vld [vmem:[%s2 + $0x20] sm:$0xff]
    %v2132 = vld [vmem:[%s2 + $0x28] sm:$0xff]
    %v2133 = vld [vmem:[%s2 + $0x30] sm:$0xff]
    %v2134 = vld [vmem:[%s2 + $0x38] sm:$0xff]
    %v2135 = vld [vmem:[%s2 + $0x40] sm:$0xff]
    %v2136 = vld [vmem:[%s2 + $0x48] sm:$0xff]
    %v2137 = vld [vmem:[%s2 + $0x50] sm:$0xff]
    %v2138 = vld [vmem:[%s2 + $0x58] sm:$0xff]
    %v2139 = vld [vmem:[%s2 + $0x60] sm:$0xff]
    %v2140 = vld [vmem:[%s2 + $0x68] sm:$0xff]
    %v2141 = vld [vmem:[%s2 + $0x70] sm:$0xff]
    %v2142 = vld [vmem:[%s2 + $0x78] sm:$0xff]
    %v2143 = vld [vmem:[%s2 + $0x80] sm:$0xff]
    %v2144 = vld [vmem:[%s2 + $0x88] sm:$0xff]
    %v2145 = vld [vmem:[%s2 + $0x90] sm:$0xff]
    %v2146 = vld [vmem:[%s2 + $0x98] sm:$0xff]
    %v2147 = vld [vmem:[%s2 + $0xa0] sm:$0xff]
    %v2148 = vld [vmem:[%s2 + $0xa8] sm:$0xff]
    %v2149 = vld [vmem:[%s2 + $0xb0] sm:$0xff]
    %v2150 = vld [vmem:[%s2 + $0xb8] sm:$0xff]
    %v2151 = vadd.f32 %v2103, 1e-05
    %v2152 = vadd.f32 %v2104, 1e-05
    %v2153 = vadd.f32 %v2105, 1e-05
    %v2154 = vadd.f32 %v2106, 1e-05
    %v2155 = vadd.f32 %v2107, 1e-05
    %v2156 = vadd.f32 %v2108, 1e-05
    %v2157 = vadd.f32 %v2109, 1e-05
    %v2158 = vadd.f32 %v2110, 1e-05
    %v2159 = vadd.f32 %v2111, 1e-05
    %v2160 = vadd.f32 %v2112, 1e-05
    %v2161 = vadd.f32 %v2113, 1e-05
    %v2162 = vadd.f32 %v2114, 1e-05
    %v2163 = vadd.f32 %v2115, 1e-05
    %v2164 = vadd.f32 %v2116, 1e-05
    %v2165 = vadd.f32 %v2117, 1e-05
    %v2166 = vadd.f32 %v2118, 1e-05
    %v2167 = vadd.f32 %v2119, 1e-05
    %v2168 = vadd.f32 %v2120, 1e-05
    %v2169 = vadd.f32 %v2121, 1e-05
    %v2170 = vadd.f32 %v2122, 1e-05
    %v2171 = vadd.f32 %v2123, 1e-05
    %v2172 = vadd.f32 %v2124, 1e-05
    %v2173 = vadd.f32 %v2125, 1e-05
    %v2174 = vadd.f32 %v2126, 1e-05
    %v2175 = vrsqrt.pop %v2151
    %v2176 = vmul.f32 %v2175, %v2151
    %v2177 = vmul.f32 %v2176, %v2175
    %v2178 = vmul.f32 0.5, %v2177
    %v2179 = vsub.f32 1.5, %v2178
    %v2180 = vmul.f32 %v2175, %v2179
    %vm2181 = vweird.f32 %v2151
    %vm2182 = vweird.f32 %v2175
    %vm2183 = vmor %vm2181, %vm2182
    %v2184 = vsel %vm2183, %v2175, %v2180
    %v2185 = vrsqrt.pop %v2152
    %v2186 = vmul.f32 %v2185, %v2152
    %v2187 = vmul.f32 %v2186, %v2185
    %v2188 = vmul.f32 0.5, %v2187
    %v2189 = vsub.f32 1.5, %v2188
    %v2190 = vmul.f32 %v2185, %v2189
    %vm2191 = vweird.f32 %v2152
    %vm2192 = vweird.f32 %v2185
    %vm2193 = vmor %vm2191, %vm2192
    %v2194 = vsel %vm2193, %v2185, %v2190
    %v2195 = vrsqrt.pop %v2153
    %v2196 = vmul.f32 %v2195, %v2153
    %v2197 = vmul.f32 %v2196, %v2195
    %v2198 = vmul.f32 0.5, %v2197
    %v2199 = vsub.f32 1.5, %v2198
    %v2200 = vmul.f32 %v2195, %v2199
    %vm2201 = vweird.f32 %v2153
    %vm2202 = vweird.f32 %v2195
    %vm2203 = vmor %vm2201, %vm2202
    %v2204 = vsel %vm2203, %v2195, %v2200
    %v2205 = vrsqrt.pop %v2154
    %v2206 = vmul.f32 %v2205, %v2154
    %v2207 = vmul.f32 %v2206, %v2205
    %v2208 = vmul.f32 0.5, %v2207
    %v2209 = vsub.f32 1.5, %v2208
    %v2210 = vmul.f32 %v2205, %v2209
    %vm2211 = vweird.f32 %v2154
    %vm2212 = vweird.f32 %v2205
    %vm2213 = vmor %vm2211, %vm2212
    %v2214 = vsel %vm2213, %v2205, %v2210
    %v2215 = vrsqrt.pop %v2155
    %v2216 = vmul.f32 %v2215, %v2155
    %v2217 = vmul.f32 %v2216, %v2215
    %v2218 = vmul.f32 0.5, %v2217
    %v2219 = vsub.f32 1.5, %v2218
    %v2220 = vmul.f32 %v2215, %v2219
    %vm2221 = vweird.f32 %v2155
    %vm2222 = vweird.f32 %v2215
    %vm2223 = vmor %vm2221, %vm2222
    %v2224 = vsel %vm2223, %v2215, %v2220
    %v2225 = vrsqrt.pop %v2156
    %v2226 = vmul.f32 %v2225, %v2156
    %v2227 = vmul.f32 %v2226, %v2225
    %v2228 = vmul.f32 0.5, %v2227
    %v2229 = vsub.f32 1.5, %v2228
    %v2230 = vmul.f32 %v2225, %v2229
    %vm2231 = vweird.f32 %v2156
    %vm2232 = vweird.f32 %v2225
    %vm2233 = vmor %vm2231, %vm2232
    %v2234 = vsel %vm2233, %v2225, %v2230
    %v2235 = vrsqrt.pop %v2157
    %v2236 = vmul.f32 %v2235, %v2157
    %v2237 = vmul.f32 %v2236, %v2235
    %v2238 = vmul.f32 0.5, %v2237
    %v2239 = vsub.f32 1.5, %v2238
    %v2240 = vmul.f32 %v2235, %v2239
    %vm2241 = vweird.f32 %v2157
    %vm2242 = vweird.f32 %v2235
    %vm2243 = vmor %vm2241, %vm2242
    %v2244 = vsel %vm2243, %v2235, %v2240
    %v2245 = vrsqrt.pop %v2158
    %v2246 = vmul.f32 %v2245, %v2158
    %v2247 = vmul.f32 %v2246, %v2245
    %v2248 = vmul.f32 0.5, %v2247
    %v2249 = vsub.f32 1.5, %v2248
    %v2250 = vmul.f32 %v2245, %v2249
    %vm2251 = vweird.f32 %v2158
    %vm2252 = vweird.f32 %v2245
    %vm2253 = vmor %vm2251, %vm2252
    %v2254 = vsel %vm2253, %v2245, %v2250
    %v2255 = vrsqrt.pop %v2159
    %v2256 = vmul.f32 %v2255, %v2159
    %v2257 = vmul.f32 %v2256, %v2255
    %v2258 = vmul.f32 0.5, %v2257
    %v2259 = vsub.f32 1.5, %v2258
    %v2260 = vmul.f32 %v2255, %v2259
    %vm2261 = vweird.f32 %v2159
    %vm2262 = vweird.f32 %v2255
    %vm2263 = vmor %vm2261, %vm2262
    %v2264 = vsel %vm2263, %v2255, %v2260
    %v2265 = vrsqrt.pop %v2160
    %v2266 = vmul.f32 %v2265, %v2160
    %v2267 = vmul.f32 %v2266, %v2265
    %v2268 = vmul.f32 0.5, %v2267
    %v2269 = vsub.f32 1.5, %v2268
    %v2270 = vmul.f32 %v2265, %v2269
    %vm2271 = vweird.f32 %v2160
    %vm2272 = vweird.f32 %v2265
    %vm2273 = vmor %vm2271, %vm2272
    %v2274 = vsel %vm2273, %v2265, %v2270
    %v2275 = vrsqrt.pop %v2161
    %v2276 = vmul.f32 %v2275, %v2161
    %v2277 = vmul.f32 %v2276, %v2275
    %v2278 = vmul.f32 0.5, %v2277
    %v2279 = vsub.f32 1.5, %v2278
    %v2280 = vmul.f32 %v2275, %v2279
    %vm2281 = vweird.f32 %v2161
    %vm2282 = vweird.f32 %v2275
    %vm2283 = vmor %vm2281, %vm2282
    %v2284 = vsel %vm2283, %v2275, %v2280
    %v2285 = vrsqrt.pop %v2162
    %v2286 = vmul.f32 %v2285, %v2162
    %v2287 = vmul.f32 %v2286, %v2285
    %v2288 = vmul.f32 0.5, %v2287
    %v2289 = vsub.f32 1.5, %v2288
    %v2290 = vmul.f32 %v2285, %v2289
    %vm2291 = vweird.f32 %v2162
    %vm2292 = vweird.f32 %v2285
    %vm2293 = vmor %vm2291, %vm2292
    %v2294 = vsel %vm2293, %v2285, %v2290
    %v2295 = vrsqrt.pop %v2163
    %v2296 = vmul.f32 %v2295, %v2163
    %v2297 = vmul.f32 %v2296, %v2295
    %v2298 = vmul.f32 0.5, %v2297
    %v2299 = vsub.f32 1.5, %v2298
    %v2300 = vmul.f32 %v2295, %v2299
    %vm2301 = vweird.f32 %v2163
    %vm2302 = vweird.f32 %v2295
    %vm2303 = vmor %vm2301, %vm2302
    %v2304 = vsel %vm2303, %v2295, %v2300
    %v2305 = vrsqrt.pop %v2164
    %v2306 = vmul.f32 %v2305, %v2164
    %v2307 = vmul.f32 %v2306, %v2305
    %v2308 = vmul.f32 0.5, %v2307
    %v2309 = vsub.f32 1.5, %v2308
    %v2310 = vmul.f32 %v2305, %v2309
    %vm2311 = vweird.f32 %v2164
    %vm2312 = vweird.f32 %v2305
    %vm2313 = vmor %vm2311, %vm2312
    %v2314 = vsel %vm2313, %v2305, %v2310
    %v2315 = vrsqrt.pop %v2165
    %v2316 = vmul.f32 %v2315, %v2165
    %v2317 = vmul.f32 %v2316, %v2315
    %v2318 = vmul.f32 0.5, %v2317
    %v2319 = vsub.f32 1.5, %v2318
    %v2320 = vmul.f32 %v2315, %v2319
    %vm2321 = vweird.f32 %v2165
    %vm2322 = vweird.f32 %v2315
    %vm2323 = vmor %vm2321, %vm2322
    %v2324 = vsel %vm2323, %v2315, %v2320
    %v2325 = vrsqrt.pop %v2166
    %v2326 = vmul.f32 %v2325, %v2166
    %v2327 = vmul.f32 %v2326, %v2325
    %v2328 = vmul.f32 0.5, %v2327
    %v2329 = vsub.f32 1.5, %v2328
    %v2330 = vmul.f32 %v2325, %v2329
    %vm2331 = vweird.f32 %v2166
    %vm2332 = vweird.f32 %v2325
    %vm2333 = vmor %vm2331, %vm2332
    %v2334 = vsel %vm2333, %v2325, %v2330
    %v2335 = vrsqrt.pop %v2167
    %v2336 = vmul.f32 %v2335, %v2167
    %v2337 = vmul.f32 %v2336, %v2335
    %v2338 = vmul.f32 0.5, %v2337
    %v2339 = vsub.f32 1.5, %v2338
    %v2340 = vmul.f32 %v2335, %v2339
    %vm2341 = vweird.f32 %v2167
    %vm2342 = vweird.f32 %v2335
    %vm2343 = vmor %vm2341, %vm2342
    %v2344 = vsel %vm2343, %v2335, %v2340
    %v2345 = vrsqrt.pop %v2168
    %v2346 = vmul.f32 %v2345, %v2168
    %v2347 = vmul.f32 %v2346, %v2345
    %v2348 = vmul.f32 0.5, %v2347
    %v2349 = vsub.f32 1.5, %v2348
    %v2350 = vmul.f32 %v2345, %v2349
    %vm2351 = vweird.f32 %v2168
    %vm2352 = vweird.f32 %v2345
    %vm2353 = vmor %vm2351, %vm2352
    %v2354 = vsel %vm2353, %v2345, %v2350
    %v2355 = vrsqrt.pop %v2169
    %v2356 = vmul.f32 %v2355, %v2169
    %v2357 = vmul.f32 %v2356, %v2355
    %v2358 = vmul.f32 0.5, %v2357
    %v2359 = vsub.f32 1.5, %v2358
    %v2360 = vmul.f32 %v2355, %v2359
    %vm2361 = vweird.f32 %v2169
    %vm2362 = vweird.f32 %v2355
    %vm2363 = vmor %vm2361, %vm2362
    %v2364 = vsel %vm2363, %v2355, %v2360
    %v2365 = vrsqrt.pop %v2170
    %v2366 = vmul.f32 %v2365, %v2170
    %v2367 = vmul.f32 %v2366, %v2365
    %v2368 = vmul.f32 0.5, %v2367
    %v2369 = vsub.f32 1.5, %v2368
    %v2370 = vmul.f32 %v2365, %v2369
    %vm2371 = vweird.f32 %v2170
    %vm2372 = vweird.f32 %v2365
    %vm2373 = vmor %vm2371, %vm2372
    %v2374 = vsel %vm2373, %v2365, %v2370
    %v2375 = vrsqrt.pop %v2171
    %v2376 = vmul.f32 %v2375, %v2171
    %v2377 = vmul.f32 %v2376, %v2375
    %v2378 = vmul.f32 0.5, %v2377
    %v2379 = vsub.f32 1.5, %v2378
    %v2380 = vmul.f32 %v2375, %v2379
    %vm2381 = vweird.f32 %v2171
    %vm2382 = vweird.f32 %v2375
    %vm2383 = vmor %vm2381, %vm2382
    %v2384 = vsel %vm2383, %v2375, %v2380
    %v2385 = vrsqrt.pop %v2172
    %v2386 = vmul.f32 %v2385, %v2172
    %v2387 = vmul.f32 %v2386, %v2385
    %v2388 = vmul.f32 0.5, %v2387
    %v2389 = vsub.f32 1.5, %v2388
    %v2390 = vmul.f32 %v2385, %v2389
    %vm2391 = vweird.f32 %v2172
    %vm2392 = vweird.f32 %v2385
    %vm2393 = vmor %vm2391, %vm2392
    %v2394 = vsel %vm2393, %v2385, %v2390
    %v2395 = vrsqrt.pop %v2173
    %v2396 = vmul.f32 %v2395, %v2173
    %v2397 = vmul.f32 %v2396, %v2395
    %v2398 = vmul.f32 0.5, %v2397
    %v2399 = vsub.f32 1.5, %v2398
    %v2400 = vmul.f32 %v2395, %v2399
    %vm2401 = vweird.f32 %v2173
    %vm2402 = vweird.f32 %v2395
    %vm2403 = vmor %vm2401, %vm2402
    %v2404 = vsel %vm2403, %v2395, %v2400
    %v2405 = vrsqrt.pop %v2174
    %v2406 = vmul.f32 %v2405, %v2174
    %v2407 = vmul.f32 %v2406, %v2405
    %v2408 = vmul.f32 0.5, %v2407
    %v2409 = vsub.f32 1.5, %v2408
    %v2410 = vmul.f32 %v2405, %v2409
    %vm2411 = vweird.f32 %v2174
    %vm2412 = vweird.f32 %v2405
    %vm2413 = vmor %vm2411, %vm2412
    %v2414 = vsel %vm2413, %v2405, %v2410
    %v2415 = vmul.f32 %v2127, %v2184
    %v2416 = vmul.f32 %v2128, %v2194
    %v2417 = vmul.f32 %v2129, %v2204
    %v2418 = vmul.f32 %v2130, %v2214
    %v2419 = vmul.f32 %v2131, %v2224
    %v2420 = vmul.f32 %v2132, %v2234
    %v2421 = vmul.f32 %v2133, %v2244
    %v2422 = vmul.f32 %v2134, %v2254
    %v2423 = vmul.f32 %v2135, %v2264
    %v2424 = vmul.f32 %v2136, %v2274
    %v2425 = vmul.f32 %v2137, %v2284
    %v2426 = vmul.f32 %v2138, %v2294
    %v2427 = vmul.f32 %v2139, %v2304
    %v2428 = vmul.f32 %v2140, %v2314
    %v2429 = vmul.f32 %v2141, %v2324
    %v2430 = vmul.f32 %v2142, %v2334
    %v2431 = vmul.f32 %v2143, %v2344
    %v2432 = vmul.f32 %v2144, %v2354
    %v2433 = vmul.f32 %v2145, %v2364
    %v2434 = vmul.f32 %v2146, %v2374
    %v2435 = vmul.f32 %v2147, %v2384
    %v2436 = vmul.f32 %v2148, %v2394
    %v2437 = vmul.f32 %v2149, %v2404
    %v2438 = vmul.f32 %v2150, %v2414
    %2440 = vset.pattern.permute.xlu0 0
    %2441 = vperm.xlu0 %2440, %v2415
    %v2442 = vpop.permute.xlu0 %2441
    %2445 = vset.pattern.permute.xlu0 0
    %2446 = vperm.xlu0 %2445, %v2416
    %v2447 = vpop.permute.xlu0 %2446
    %2450 = vset.pattern.permute.xlu0 0
    %2451 = vperm.xlu0 %2450, %v2417
    %v2452 = vpop.permute.xlu0 %2451
    %2455 = vset.pattern.permute.xlu0 0
    %2456 = vperm.xlu0 %2455, %v2418
    %v2457 = vpop.permute.xlu0 %2456
    %2460 = vset.pattern.permute.xlu0 0
    %2461 = vperm.xlu0 %2460, %v2419
    %v2462 = vpop.permute.xlu0 %2461
    %2465 = vset.pattern.permute.xlu0 0
    %2466 = vperm.xlu0 %2465, %v2420
    %v2467 = vpop.permute.xlu0 %2466
    %2470 = vset.pattern.permute.xlu0 0
    %2471 = vperm.xlu0 %2470, %v2421
    %v2472 = vpop.permute.xlu0 %2471
    %2475 = vset.pattern.permute.xlu0 0
    %2476 = vperm.xlu0 %2475, %v2422
    %v2477 = vpop.permute.xlu0 %2476
    %2480 = vset.pattern.permute.xlu0 0
    %2481 = vperm.xlu0 %2480, %v2423
    %v2482 = vpop.permute.xlu0 %2481
    %2485 = vset.pattern.permute.xlu0 0
    %2486 = vperm.xlu0 %2485, %v2424
    %v2487 = vpop.permute.xlu0 %2486
    %2490 = vset.pattern.permute.xlu0 0
    %2491 = vperm.xlu0 %2490, %v2425
    %v2492 = vpop.permute.xlu0 %2491
    %2495 = vset.pattern.permute.xlu0 0
    %2496 = vperm.xlu0 %2495, %v2426
    %v2497 = vpop.permute.xlu0 %2496
    %2500 = vset.pattern.permute.xlu0 0
    %2501 = vperm.xlu0 %2500, %v2427
    %v2502 = vpop.permute.xlu0 %2501
    %2505 = vset.pattern.permute.xlu0 0
    %2506 = vperm.xlu0 %2505, %v2428
    %v2507 = vpop.permute.xlu0 %2506
    %2510 = vset.pattern.permute.xlu0 0
    %2511 = vperm.xlu0 %2510, %v2429
    %v2512 = vpop.permute.xlu0 %2511
    %2515 = vset.pattern.permute.xlu0 0
    %2516 = vperm.xlu0 %2515, %v2430
    %v2517 = vpop.permute.xlu0 %2516
    %2520 = vset.pattern.permute.xlu0 0
    %2521 = vperm.xlu0 %2520, %v2431
    %v2522 = vpop.permute.xlu0 %2521
    %2525 = vset.pattern.permute.xlu0 0
    %2526 = vperm.xlu0 %2525, %v2432
    %v2527 = vpop.permute.xlu0 %2526
    %2530 = vset.pattern.permute.xlu0 0
    %2531 = vperm.xlu0 %2530, %v2433
    %v2532 = vpop.permute.xlu0 %2531
    %2535 = vset.pattern.permute.xlu0 0
    %2536 = vperm.xlu0 %2535, %v2434
    %v2537 = vpop.permute.xlu0 %2536
    %2540 = vset.pattern.permute.xlu0 0
    %2541 = vperm.xlu0 %2540, %v2435
    %v2542 = vpop.permute.xlu0 %2541
    %2545 = vset.pattern.permute.xlu0 0
    %2546 = vperm.xlu0 %2545, %v2436
    %v2547 = vpop.permute.xlu0 %2546
    %2550 = vset.pattern.permute.xlu0 0
    %2551 = vperm.xlu0 %2550, %v2437
    %v2552 = vpop.permute.xlu0 %2551
    %2555 = vset.pattern.permute.xlu0 0
    %2556 = vperm.xlu0 %2555, %v2438
    %v2557 = vpop.permute.xlu0 %2556
    %v2559 = vmul.f32 %v1911, %v2442
    %v2560 = vmul.f32 %v1912, %v2442
    %v2561 = vmul.f32 %v1913, %v2447
    %v2562 = vmul.f32 %v1914, %v2447
    %v2563 = vmul.f32 %v1915, %v2452
    %v2564 = vmul.f32 %v1916, %v2452
    %v2565 = vmul.f32 %v1917, %v2457
    %v2566 = vmul.f32 %v1918, %v2457
    %v2567 = vmul.f32 %v1919, %v2462
    %v2568 = vmul.f32 %v1920, %v2462
    %v2569 = vmul.f32 %v1921, %v2467
    %v2570 = vmul.f32 %v1922, %v2467
    %v2571 = vmul.f32 %v1923, %v2472
    %v2572 = vmul.f32 %v1924, %v2472
    %v2573 = vmul.f32 %v1925, %v2477
    %v2574 = vmul.f32 %v1926, %v2477
    %v2575 = vmul.f32 %v1927, %v2482
    %v2576 = vmul.f32 %v1928, %v2482
    %v2577 = vmul.f32 %v1929, %v2487
    %v2578 = vmul.f32 %v1930, %v2487
    %v2579 = vmul.f32 %v1931, %v2492
    %v2580 = vmul.f32 %v1932, %v2492
    %v2581 = vmul.f32 %v1933, %v2497
    %v2582 = vmul.f32 %v1934, %v2497
    %v2583 = vmul.f32 %v1935, %v2502
    %v2584 = vmul.f32 %v1936, %v2502
    %v2585 = vmul.f32 %v1937, %v2507
    %v2586 = vmul.f32 %v1938, %v2507
    %v2587 = vmul.f32 %v1939, %v2512
    %v2588 = vmul.f32 %v1940, %v2512
    %v2589 = vmul.f32 %v1941, %v2517
    %v2590 = vmul.f32 %v1942, %v2517
    %v2591 = vmul.f32 %v1943, %v2522
    %v2592 = vmul.f32 %v1944, %v2522
    %v2593 = vmul.f32 %v1945, %v2527
    %v2594 = vmul.f32 %v1946, %v2527
    %v2595 = vmul.f32 %v1947, %v2532
    %v2596 = vmul.f32 %v1948, %v2532
    %v2597 = vmul.f32 %v1949, %v2537
    %v2598 = vmul.f32 %v1950, %v2537
    %v2599 = vmul.f32 %v1951, %v2542
    %v2600 = vmul.f32 %v1952, %v2542
    %v2601 = vmul.f32 %v1953, %v2547
    %v2602 = vmul.f32 %v1954, %v2547
    %v2603 = vmul.f32 %v1955, %v2552
    %v2604 = vmul.f32 %v1956, %v2552
    %v2605 = vmul.f32 %v1957, %v2557
    %v2606 = vmul.f32 %v1958, %v2557
    %v2607 = vld [vmem:[%s3] sm:$0xff]
    %v2608 = vld [vmem:[%s3 + $0x8] sm:$0xff]
    %v2609 = vld [vmem:[%s3 + $0x10] sm:$0xff]
    %v2610 = vld [vmem:[%s3 + $0x18] sm:$0xff]
    %v2611 = vld [vmem:[%s3 + $0x20] sm:$0xff]
    %v2612 = vld [vmem:[%s3 + $0x28] sm:$0xff]
    %v2613 = vld [vmem:[%s3 + $0x30] sm:$0xff]
    %v2614 = vld [vmem:[%s3 + $0x38] sm:$0xff]
    %v2615 = vld [vmem:[%s3 + $0x40] sm:$0xff]
    %v2616 = vld [vmem:[%s3 + $0x48] sm:$0xff]
    %v2617 = vld [vmem:[%s3 + $0x50] sm:$0xff]
    %v2618 = vld [vmem:[%s3 + $0x58] sm:$0xff]
    %v2619 = vld [vmem:[%s3 + $0x60] sm:$0xff]
    %v2620 = vld [vmem:[%s3 + $0x68] sm:$0xff]
    %v2621 = vld [vmem:[%s3 + $0x70] sm:$0xff]
    %v2622 = vld [vmem:[%s3 + $0x78] sm:$0xff]
    %v2623 = vld [vmem:[%s3 + $0x80] sm:$0xff]
    %v2624 = vld [vmem:[%s3 + $0x88] sm:$0xff]
    %v2625 = vld [vmem:[%s3 + $0x90] sm:$0xff]
    %v2626 = vld [vmem:[%s3 + $0x98] sm:$0xff]
    %v2627 = vld [vmem:[%s3 + $0xa0] sm:$0xff]
    %v2628 = vld [vmem:[%s3 + $0xa8] sm:$0xff]
    %v2629 = vld [vmem:[%s3 + $0xb0] sm:$0xff]
    %v2630 = vld [vmem:[%s3 + $0xb8] sm:$0xff]
    %2632 = vset.pattern.permute.xlu0 0
    %2633 = vperm.xlu0 %2632, %v2607
    %v2634 = vpop.permute.xlu0 %2633
    %2637 = vset.pattern.permute.xlu0 0
    %2638 = vperm.xlu0 %2637, %v2608
    %v2639 = vpop.permute.xlu0 %2638
    %2642 = vset.pattern.permute.xlu0 0
    %2643 = vperm.xlu0 %2642, %v2609
    %v2644 = vpop.permute.xlu0 %2643
    %2647 = vset.pattern.permute.xlu0 0
    %2648 = vperm.xlu0 %2647, %v2610
    %v2649 = vpop.permute.xlu0 %2648
    %2652 = vset.pattern.permute.xlu0 0
    %2653 = vperm.xlu0 %2652, %v2611
    %v2654 = vpop.permute.xlu0 %2653
    %2657 = vset.pattern.permute.xlu0 0
    %2658 = vperm.xlu0 %2657, %v2612
    %v2659 = vpop.permute.xlu0 %2658
    %2662 = vset.pattern.permute.xlu0 0
    %2663 = vperm.xlu0 %2662, %v2613
    %v2664 = vpop.permute.xlu0 %2663
    %2667 = vset.pattern.permute.xlu0 0
    %2668 = vperm.xlu0 %2667, %v2614
    %v2669 = vpop.permute.xlu0 %2668
    %2672 = vset.pattern.permute.xlu0 0
    %2673 = vperm.xlu0 %2672, %v2615
    %v2674 = vpop.permute.xlu0 %2673
    %2677 = vset.pattern.permute.xlu0 0
    %2678 = vperm.xlu0 %2677, %v2616
    %v2679 = vpop.permute.xlu0 %2678
    %2682 = vset.pattern.permute.xlu0 0
    %2683 = vperm.xlu0 %2682, %v2617
    %v2684 = vpop.permute.xlu0 %2683
    %2687 = vset.pattern.permute.xlu0 0
    %2688 = vperm.xlu0 %2687, %v2618
    %v2689 = vpop.permute.xlu0 %2688
    %2692 = vset.pattern.permute.xlu0 0
    %2693 = vperm.xlu0 %2692, %v2619
    %v2694 = vpop.permute.xlu0 %2693
    %2697 = vset.pattern.permute.xlu0 0
    %2698 = vperm.xlu0 %2697, %v2620
    %v2699 = vpop.permute.xlu0 %2698
    %2702 = vset.pattern.permute.xlu0 0
    %2703 = vperm.xlu0 %2702, %v2621
    %v2704 = vpop.permute.xlu0 %2703
    %2707 = vset.pattern.permute.xlu0 0
    %2708 = vperm.xlu0 %2707, %v2622
    %v2709 = vpop.permute.xlu0 %2708
    %2712 = vset.pattern.permute.xlu0 0
    %2713 = vperm.xlu0 %2712, %v2623
    %v2714 = vpop.permute.xlu0 %2713
    %2717 = vset.pattern.permute.xlu0 0
    %2718 = vperm.xlu0 %2717, %v2624
    %v2719 = vpop.permute.xlu0 %2718
    %2722 = vset.pattern.permute.xlu0 0
    %2723 = vperm.xlu0 %2722, %v2625
    %v2724 = vpop.permute.xlu0 %2723
    %2727 = vset.pattern.permute.xlu0 0
    %2728 = vperm.xlu0 %2727, %v2626
    %v2729 = vpop.permute.xlu0 %2728
    %2732 = vset.pattern.permute.xlu0 0
    %2733 = vperm.xlu0 %2732, %v2627
    %v2734 = vpop.permute.xlu0 %2733
    %2737 = vset.pattern.permute.xlu0 0
    %2738 = vperm.xlu0 %2737, %v2628
    %v2739 = vpop.permute.xlu0 %2738
    %2742 = vset.pattern.permute.xlu0 0
    %2743 = vperm.xlu0 %2742, %v2629
    %v2744 = vpop.permute.xlu0 %2743
    %2747 = vset.pattern.permute.xlu0 0
    %2748 = vperm.xlu0 %2747, %v2630
    %v2749 = vpop.permute.xlu0 %2748
    %v2751 = vadd.f32 %v2559, %v2634
    %v2752 = vadd.f32 %v2560, %v2634
    %v2753 = vadd.f32 %v2561, %v2639
    %v2754 = vadd.f32 %v2562, %v2639
    %v2755 = vadd.f32 %v2563, %v2644
    %v2756 = vadd.f32 %v2564, %v2644
    %v2757 = vadd.f32 %v2565, %v2649
    %v2758 = vadd.f32 %v2566, %v2649
    %v2759 = vadd.f32 %v2567, %v2654
    %v2760 = vadd.f32 %v2568, %v2654
    %v2761 = vadd.f32 %v2569, %v2659
    %v2762 = vadd.f32 %v2570, %v2659
    %v2763 = vadd.f32 %v2571, %v2664
    %v2764 = vadd.f32 %v2572, %v2664
    %v2765 = vadd.f32 %v2573, %v2669
    %v2766 = vadd.f32 %v2574, %v2669
    %v2767 = vadd.f32 %v2575, %v2674
    %v2768 = vadd.f32 %v2576, %v2674
    %v2769 = vadd.f32 %v2577, %v2679
    %v2770 = vadd.f32 %v2578, %v2679
    %v2771 = vadd.f32 %v2579, %v2684
    %v2772 = vadd.f32 %v2580, %v2684
    %v2773 = vadd.f32 %v2581, %v2689
    %v2774 = vadd.f32 %v2582, %v2689
    %v2775 = vadd.f32 %v2583, %v2694
    %v2776 = vadd.f32 %v2584, %v2694
    %v2777 = vadd.f32 %v2585, %v2699
    %v2778 = vadd.f32 %v2586, %v2699
    %v2779 = vadd.f32 %v2587, %v2704
    %v2780 = vadd.f32 %v2588, %v2704
    %v2781 = vadd.f32 %v2589, %v2709
    %v2782 = vadd.f32 %v2590, %v2709
    %v2783 = vadd.f32 %v2591, %v2714
    %v2784 = vadd.f32 %v2592, %v2714
    %v2785 = vadd.f32 %v2593, %v2719
    %v2786 = vadd.f32 %v2594, %v2719
    %v2787 = vadd.f32 %v2595, %v2724
    %v2788 = vadd.f32 %v2596, %v2724
    %v2789 = vadd.f32 %v2597, %v2729
    %v2790 = vadd.f32 %v2598, %v2729
    %v2791 = vadd.f32 %v2599, %v2734
    %v2792 = vadd.f32 %v2600, %v2734
    %v2793 = vadd.f32 %v2601, %v2739
    %v2794 = vadd.f32 %v2602, %v2739
    %v2795 = vadd.f32 %v2603, %v2744
    %v2796 = vadd.f32 %v2604, %v2744
    %v2797 = vadd.f32 %v2605, %v2749
    %v2798 = vadd.f32 %v2606, %v2749
    %v2799 = vmax.f32 %v2751, 0.0
    %v2800 = vmax.f32 %v2752, 0.0
    %v2801 = vmax.f32 %v2753, 0.0
    %v2802 = vmax.f32 %v2754, 0.0
    %v2803 = vmax.f32 %v2755, 0.0
    %v2804 = vmax.f32 %v2756, 0.0
    %v2805 = vmax.f32 %v2757, 0.0
    %v2806 = vmax.f32 %v2758, 0.0
    %v2807 = vmax.f32 %v2759, 0.0
    %v2808 = vmax.f32 %v2760, 0.0
    %v2809 = vmax.f32 %v2761, 0.0
    %v2810 = vmax.f32 %v2762, 0.0
    %v2811 = vmax.f32 %v2763, 0.0
    %v2812 = vmax.f32 %v2764, 0.0
    %v2813 = vmax.f32 %v2765, 0.0
    %v2814 = vmax.f32 %v2766, 0.0
    %v2815 = vmax.f32 %v2767, 0.0
    %v2816 = vmax.f32 %v2768, 0.0
    %v2817 = vmax.f32 %v2769, 0.0
    %v2818 = vmax.f32 %v2770, 0.0
    %v2819 = vmax.f32 %v2771, 0.0
    %v2820 = vmax.f32 %v2772, 0.0
    %v2821 = vmax.f32 %v2773, 0.0
    %v2822 = vmax.f32 %v2774, 0.0
    %v2823 = vmax.f32 %v2775, 0.0
    %v2824 = vmax.f32 %v2776, 0.0
    %v2825 = vmax.f32 %v2777, 0.0
    %v2826 = vmax.f32 %v2778, 0.0
    %v2827 = vmax.f32 %v2779, 0.0
    %v2828 = vmax.f32 %v2780, 0.0
    %v2829 = vmax.f32 %v2781, 0.0
    %v2830 = vmax.f32 %v2782, 0.0
    %v2831 = vmax.f32 %v2783, 0.0
    %v2832 = vmax.f32 %v2784, 0.0
    %v2833 = vmax.f32 %v2785, 0.0
    %v2834 = vmax.f32 %v2786, 0.0
    %v2835 = vmax.f32 %v2787, 0.0
    %v2836 = vmax.f32 %v2788, 0.0
    %v2837 = vmax.f32 %v2789, 0.0
    %v2838 = vmax.f32 %v2790, 0.0
    %v2839 = vmax.f32 %v2791, 0.0
    %v2840 = vmax.f32 %v2792, 0.0
    %v2841 = vmax.f32 %v2793, 0.0
    %v2842 = vmax.f32 %v2794, 0.0
    %v2843 = vmax.f32 %v2795, 0.0
    %v2844 = vmax.f32 %v2796, 0.0
    %v2845 = vmax.f32 %v2797, 0.0
    %v2846 = vmax.f32 %v2798, 0.0
    %2847 = vst [vmem:[#allocation2] sm:$0xff] %v2799
    %2848 = vst.msk [vmem:[#allocation2 + $0x8] sm:$0xff] %vm1790, %v2800
    %2849 = vst [vmem:[#allocation2 + $0x10] sm:$0xff] %v2801
    %2850 = vst.msk [vmem:[#allocation2 + $0x18] sm:$0xff] %vm1790, %v2802
    %2851 = vst [vmem:[#allocation2 + $0x20] sm:$0xff] %v2803
    %2852 = vst.msk [vmem:[#allocation2 + $0x28] sm:$0xff] %vm1790, %v2804
    %2853 = vst [vmem:[#allocation2 + $0x30] sm:$0xff] %v2805
    %2854 = vst.msk [vmem:[#allocation2 + $0x38] sm:$0xff] %vm1790, %v2806
    %2855 = vst [vmem:[#allocation2 + $0x40] sm:$0xff] %v2807
    %2856 = vst.msk [vmem:[#allocation2 + $0x48] sm:$0xff] %vm1790, %v2808
    %2857 = vst [vmem:[#allocation2 + $0x50] sm:$0xff] %v2809
    %2858 = vst.msk [vmem:[#allocation2 + $0x58] sm:$0xff] %vm1790, %v2810
    %2859 = vst [vmem:[#allocation2 + $0x60] sm:$0xff] %v2811
    %2860 = vst.msk [vmem:[#allocation2 + $0x68] sm:$0xff] %vm1790, %v2812
    %2861 = vst [vmem:[#allocation2 + $0x70] sm:$0xff] %v2813
    %2862 = vst.msk [vmem:[#allocation2 + $0x78] sm:$0xff] %vm1790, %v2814
    %2863 = vst [vmem:[#allocation2 + $0x80] sm:$0xff] %v2815
    %2864 = vst.msk [vmem:[#allocation2 + $0x88] sm:$0xff] %vm1790, %v2816
    %2865 = vst [vmem:[#allocation2 + $0x90] sm:$0xff] %v2817
    %2866 = vst.msk [vmem:[#allocation2 + $0x98] sm:$0xff] %vm1790, %v2818
    %2867 = vst [vmem:[#allocation2 + $0xa0] sm:$0xff] %v2819
    %2868 = vst.msk [vmem:[#allocation2 + $0xa8] sm:$0xff] %vm1790, %v2820
    %2869 = vst [vmem:[#allocation2 + $0xb0] sm:$0xff] %v2821
    %2870 = vst.msk [vmem:[#allocation2 + $0xb8] sm:$0xff] %vm1790, %v2822
    %2871 = vst [vmem:[#allocation2 + $0xc0] sm:$0xff] %v2823
    %2872 = vst.msk [vmem:[#allocation2 + $0xc8] sm:$0xff] %vm1790, %v2824
    %2873 = vst [vmem:[#allocation2 + $0xd0] sm:$0xff] %v2825
    %2874 = vst.msk [vmem:[#allocation2 + $0xd8] sm:$0xff] %vm1790, %v2826
    %2875 = vst [vmem:[#allocation2 + $0xe0] sm:$0xff] %v2827
    %2876 = vst.msk [vmem:[#allocation2 + $0xe8] sm:$0xff] %vm1790, %v2828
    %2877 = vst [vmem:[#allocation2 + $0xf0] sm:$0xff] %v2829
    %2878 = vst.msk [vmem:[#allocation2 + $0xf8] sm:$0xff] %vm1790, %v2830
    %2879 = vst [vmem:[#allocation2 + $0x100] sm:$0xff] %v2831
    %2880 = vst.msk [vmem:[#allocation2 + $0x108] sm:$0xff] %vm1790, %v2832
    %2881 = vst [vmem:[#allocation2 + $0x110] sm:$0xff] %v2833
    %2882 = vst.msk [vmem:[#allocation2 + $0x118] sm:$0xff] %vm1790, %v2834
    %2883 = vst [vmem:[#allocation2 + $0x120] sm:$0xff] %v2835
    %2884 = vst.msk [vmem:[#allocation2 + $0x128] sm:$0xff] %vm1790, %v2836
    %2885 = vst [vmem:[#allocation2 + $0x130] sm:$0xff] %v2837
    %2886 = vst.msk [vmem:[#allocation2 + $0x138] sm:$0xff] %vm1790, %v2838
    %2887 = vst [vmem:[#allocation2 + $0x140] sm:$0xff] %v2839
    %2888 = vst.msk [vmem:[#allocation2 + $0x148] sm:$0xff] %vm1790, %v2840
    %2889 = vst [vmem:[#allocation2 + $0x150] sm:$0xff] %v2841
    %2890 = vst.msk [vmem:[#allocation2 + $0x158] sm:$0xff] %vm1790, %v2842
    %2891 = vst [vmem:[#allocation2 + $0x160] sm:$0xff] %v2843
    %2892 = vst.msk [vmem:[#allocation2 + $0x168] sm:$0xff] %vm1790, %v2844
    %2893 = vst [vmem:[#allocation2 + $0x170] sm:$0xff] %v2845
    %2894 = vst.msk [vmem:[#allocation2 + $0x178] sm:$0xff] %vm1790, %v2846
    // Predicated region
    $region18: #{tpu_custom_call.1} parent=1 // pred_check
      _
    $region19: #{tpu_custom_call.1} parent=1 // pred_check_branch
      %2896 = sbr.rel (0) target = $region21
    $region20: #{tpu_custom_call.1} parent=1 // pred_region
      %2898 = vsyncadd [#allocation3], 0
      %s2899 = sshll.u32 [#allocation2], 4
      %s2900 = int_to_ptr.vmem [resolvable:$true] %s2899
      %s2901 = sshll.u32 %s4, 4
      %s2902 = int_to_ptr.hbm [resolvable:$true] %s2901
      %2907 = dma.vmem_to_hbm [thread:$0]  %s2900, 6144, %s2902, [#allocation3], 256, 256, 16
    $region21: #{tpu_custom_call.1} parent=1 // pred_fallthru
      _
    // Predicated region
    $region22: #{tpu_custom_call.1} parent=1 // pred_check
      _
    $region23: #{tpu_custom_call.1} parent=1 // pred_check_branch
      %2909 = sbr.rel (0) target = $region25
    $region24: #{tpu_custom_call.1} parent=1 // pred_region
      %2911 = dma.done [#allocation3], 6144
    $region25: #{tpu_custom_call.1} parent=1 // pred_fallthru
      _
    %2912 = vsyncpa [#allocation3], 1

</llo_original>
